<compile_context>
chip_gen: v5e
topology: v5e:2x2
jax: 0.10.0
libtpu: 0.0.40
codegen_flags: <defaults>
</compile_context>

<pallas_src>
import functools

import jax
import jax.numpy as jnp
from jax.experimental import pallas as pl
from jax.experimental.pallas import tpu as pltpu


def _round_up(v, m):
    return ((v + m - 1) // m) * m


def _ae_kernel(x_ref, we_ref, be_ref, wd_ref, bd_ref, enc_ref, rec_ref):
    """Fused encoder + decoder for one batch tile.

    x_ref   : (TB, DIM)  input tile (caller dtype, cast to bf16 here)
    we_ref  : (DIM, HID) bf16 encoder weight (pre-transposed)
    be_ref  : (1, HID)   f32  encoder bias
    wd_ref  : (HID, DIM) bf16 decoder weight (pre-transposed)
    bd_ref  : (1, DIM)   f32  decoder bias
    enc_ref : (TB, HID)  output: ReLU(x W_e + b_e)
    rec_ref : (TB, DIM)  output: ReLU(enc W_d + b_d)
    """
    x = x_ref[...].astype(jnp.bfloat16)

    # Encoder: bf16 MXU matmul, f32 accumulate, f32 bias + ReLU.
    h = jnp.dot(x, we_ref[...], preferred_element_type=jnp.float32)
    h = jnp.maximum(h + be_ref[...], 0.0)
    enc_ref[...] = h.astype(enc_ref.dtype)

    # Decoder: downcast activations to bf16 for the second MXU matmul.
    r = jnp.dot(h.astype(jnp.bfloat16), wd_ref[...],
                preferred_element_type=jnp.float32)
    r = jnp.maximum(r + bd_ref[...], 0.0)
    rec_ref[...] = r.astype(rec_ref.dtype)


def _auto_tile_b(B, dim, hid, x_bytes, out_bytes):
    """Batch-tile heuristic: as big as possible (cap 1024) to amortize the
    ~0.35us/grid-step overhead; split into >=2 grid steps only when each tile
    keeps >= 256 rows (useful for v7x megacore, near-free elsewhere); shrink
    if streaming blocks would exceed a conservative 16 MiB budget."""
    tb = min(1024, _round_up(B, 8))
    if B >= 512:
        tb = min(tb, max(256, _round_up(pl.cdiv(B, 2), 8)))

    def _stream_bytes(t):
        # x tile + enc tile + rec tile, double-buffered.
        return 2 * t * (dim * x_bytes + (hid + dim) * out_bytes)

    while tb > 8 and _stream_bytes(tb) > 16 * 2**20:
        tb = max(8, (tb // 2) // 8 * 8)
    return tb


@functools.partial(jax.jit, static_argnames=("out_dtype", "tile_b"))
def auto_encoder_forward(x, w_enc, b_enc, w_dec, b_dec, *,
                         out_dtype=jnp.bfloat16, tile_b=None):
    """Fused AutoEncoder forward via pallas_call.

    Args:
      x     : (B, dim)    input (f32 or bf16), streamed unpadded.
      w_enc : (dim, hid)  bf16 encoder weight (transposed vs PyTorch (hid,dim)).
      b_enc : (1, hid)    f32 encoder bias.
      w_dec : (hid, dim)  bf16 decoder weight.
      b_dec : (1, dim)    f32 decoder bias.
      out_dtype: output dtype.  bf16 by default (matmuls are bf16 anyway and it
                 halves output HBM traffic); pass jnp.float32 to match the
                 PyTorch dtype exactly.
    Returns:
      (xenc, xrec) with shapes (B, hid) and (B, dim), dtype out_dtype.
    """
    B, dim = x.shape
    hid = w_enc.shape[1]
    x_bytes = jnp.dtype(x.dtype).itemsize
    out_bytes = jnp.dtype(out_dtype).itemsize

    if tile_b is None:
        tile_b = _auto_tile_b(B, dim, hid, x_bytes, out_bytes)

    # Pad batch rows only when B is not a multiple of the tile.  Padded rows
    # produce ReLU(bias) garbage and are sliced off below (rows only; the
    # feature dims are never padded/sliced anymore).
    B_p = _round_up(B, tile_b)
    xp = x if B_p == B else jnp.zeros((B_p, dim), x.dtype).at[:B].set(x)

    grid = (B_p // tile_b,)

    # VMEM budget: streaming blocks double-buffered + resident weights/biases
    # single-buffered (constant index_map => fetched once), plus headroom.
    # Clamped to 48 MiB so there is slack under v7x's 64 MiB per-core VMEM.
    stream_bytes = 2 * tile_b * (dim * x_bytes + (hid + dim) * out_bytes)
    const_bytes = 2 * dim * hid * 2 + (hid + dim) * 4
    vmem_limit = int(min(48 * 2**20,
                         max(16 * 2**20,
                             stream_bytes + const_bytes + (2 << 20))))

    cost = pl.CostEstimate(
        flops=4 * B_p * dim * hid,   # two (B,dim)x(dim,hid)-sized matmuls
        transcendentals=0,
        bytes_accessed=(B_p * (dim * x_bytes + (hid + dim) * out_bytes)
                        + const_bytes),
    )

    out_shapes = (
        jax.ShapeDtypeStruct((B_p, hid), out_dtype),
        jax.ShapeDtypeStruct((B_p, dim), out_dtype),
    )

    enc_p, rec_p = pl.pallas_call(
        _ae_kernel,
        out_shape=out_shapes,
        grid_spec=pltpu.PrefetchScalarGridSpec(
            num_scalar_prefetch=0,
            grid=grid,
            in_specs=[
                pl.BlockSpec((tile_b, dim), lambda i: (i, 0)),   # x tile
                pl.BlockSpec((dim, hid), lambda i: (0, 0)),      # W_enc (whole)
                pl.BlockSpec((1, hid), lambda i: (0, 0)),        # b_enc
                pl.BlockSpec((hid, dim), lambda i: (0, 0)),      # W_dec (whole)
                pl.BlockSpec((1, dim), lambda i: (0, 0)),        # b_dec
            ],
            out_specs=[
                pl.BlockSpec((tile_b, hid), lambda i: (i, 0)),   # xenc tile
                pl.BlockSpec((tile_b, dim), lambda i: (i, 0)),   # xrec tile
            ],
        ),
        compiler_params=pltpu.CompilerParams(
            dimension_semantics=("parallel",),
            vmem_limit_bytes=vmem_limit,
        ),
        cost_estimate=cost,
    )(xp, w_enc, b_enc, w_dec, b_dec)

    if B_p != B:
        enc_p, rec_p = enc_p[:B], rec_p[:B]
    return enc_p, rec_p


def init_autoencoder_params(key, dim, hid_dim):
    """PyTorch-Linear-style init: U(-1/sqrt(fan_in), 1/sqrt(fan_in)).

    Weights are returned pre-transposed as (in_features, out_features), f32.
    """
    k1, k2, k3, k4 = jax.random.split(key, 4)
    bound_e = 1.0 / (dim ** 0.5)
    bound_d = 1.0 / (hid_dim ** 0.5)
    w_enc = jax.random.uniform(k1, (dim, hid_dim), jnp.float32, -bound_e, bound_e)
    b_enc = jax.random.uniform(k2, (hid_dim,), jnp.float32, -bound_e, bound_e)
    w_dec = jax.random.uniform(k3, (hid_dim, dim), jnp.float32, -bound_d, bound_d)
    b_dec = jax.random.uniform(k4, (dim,), jnp.float32, -bound_d, bound_d)
    return w_enc, b_enc, w_dec, b_dec


def prepare_autoencoder_params(w_enc, b_enc, w_dec, b_dec):
    """One-time conversion of f32 params to the kernel layout: bf16 weights
    (in, out), f32 biases as (1, out) row tiles.  Do this once, not per call."""
    return (w_enc.astype(jnp.bfloat16),
            b_enc.astype(jnp.float32).reshape(1, -1),
            w_dec.astype(jnp.bfloat16),
            b_dec.astype(jnp.float32).reshape(1, -1))


if __name__ == "__main__":
    # Module defaults: dim = hid_dim = 300, nlayer = 1.  Small batch for the
    # demo; the kernel streams 300-wide rows unpadded and auto-sizes the tile.
    B, DIM, HID = 64, 300, 300

    key = jax.random.PRNGKey(0)
    kx, kp = jax.random.split(key)
    x = jax.random.normal(kx, (B, DIM), dtype=jnp.float32)
    w_enc, b_enc, w_dec, b_dec = init_autoencoder_params(kp, DIM, HID)
    params = prepare_autoencoder_params(w_enc, b_enc, w_dec, b_dec)

    xenc, xrec = auto_encoder_forward(x, *params)
    jax.block_until_ready((xenc, xrec))

    # Pure-JAX reference with the same mixed precision (bf16 matmul operands,
    # f32 accumulation / bias / ReLU); outputs rounded to bf16 like the kernel.
    xb = x.astype(jnp.bfloat16)
    web = w_enc.astype(jnp.bfloat16)
    wdb = w_dec.astype(jnp.bfloat16)
    ref_enc = jnp.maximum(
        jnp.dot(xb, web, preferred_element_type=jnp.float32) + b_enc, 0.0)
    ref_rec = jnp.maximum(
        jnp.dot(ref_enc.astype(jnp.bfloat16), wdb,
                preferred_element_type=jnp.float32) + b_dec, 0.0)

    assert xenc.shape == (B, HID) and xrec.shape == (B, DIM)
    assert xenc.dtype == jnp.bfloat16 and xrec.dtype == jnp.bfloat16
    assert jnp.allclose(xenc.astype(jnp.float32),
                        ref_enc.astype(jnp.bfloat16).astype(jnp.float32),
                        atol=2e-2, rtol=2e-2)
    assert jnp.allclose(xrec.astype(jnp.float32),
                        ref_rec.astype(jnp.bfloat16).astype(jnp.float32),
                        atol=2e-2, rtol=2e-2)

    print("KERNEL_OK")
</pallas_src>

<mosaic_0001>
module attributes {stable_mosaic.version = 11 : i64} {
  func.func @_ae_kernel(%arg0: i32, %arg1: memref<64x300xf32, #tpu.memory_space<vmem>>, %arg2: memref<300x300xbf16, #tpu.memory_space<vmem>>, %arg3: memref<1x300xf32, #tpu.memory_space<vmem>>, %arg4: memref<300x300xbf16, #tpu.memory_space<vmem>>, %arg5: memref<1x300xf32, #tpu.memory_space<vmem>>, %arg6: memref<64x300xbf16, #tpu.memory_space<vmem>>, %arg7: memref<64x300xbf16, #tpu.memory_space<vmem>>) attributes {dimension_semantics = [#tpu.dimension_semantics<parallel>], iteration_bounds = array<i64: 1>, scalar_prefetch = 0 : i64, scratch_operands = 0 : i64, tpu.core_type = #tpu.core_type<tc>, window_params = [{transform_indices = @transform_0, window_bounds = array<i64: 64, 300>}, {pipeline_mode = #tpu.pipeline_mode<synchronous>, transform_indices = @transform_1, window_bounds = array<i64: 300, 300>}, {pipeline_mode = #tpu.pipeline_mode<synchronous>, transform_indices = @transform_2, window_bounds = array<i64: 1, 300>}, {pipeline_mode = #tpu.pipeline_mode<synchronous>, transform_indices = @transform_3, window_bounds = array<i64: 300, 300>}, {pipeline_mode = #tpu.pipeline_mode<synchronous>, transform_indices = @transform_4, window_bounds = array<i64: 1, 300>}, {transform_indices = @transform_5, window_bounds = array<i64: 64, 300>}, {transform_indices = @transform_6, window_bounds = array<i64: 64, 300>}]} {
    %c0 = arith.constant 0 : index
    %c0_0 = arith.constant 0 : index
    %0 = vector.load %arg1[%c0, %c0_0] : memref<64x300xf32, #tpu.memory_space<vmem>>, vector<64x300xf32>
    %1 = arith.truncf %0 : vector<64x300xf32> to vector<64x300xbf16>
    %c0_1 = arith.constant 0 : index
    %c0_2 = arith.constant 0 : index
    %2 = vector.load %arg2[%c0_1, %c0_2] : memref<300x300xbf16, #tpu.memory_space<vmem>>, vector<300x300xbf16>
    %cst = arith.constant dense<0.000000e+00> : vector<64x300xf32>
    %3 = tpu.matmul %1, %2, %cst {dimension_numbers = #tpu.dot_dimension_numbers<[1], [0], [0], [1], [0, 0, 1, 1], [], []>} : vector<64x300xbf16>, vector<300x300xbf16>, vector<64x300xf32> -> vector<64x300xf32>
    %c0_3 = arith.constant 0 : index
    %c0_4 = arith.constant 0 : index
    %4 = vector.load %arg3[%c0_3, %c0_4] : memref<1x300xf32, #tpu.memory_space<vmem>>, vector<1x300xf32>
    %5 = vector.broadcast %4 : vector<1x300xf32> to vector<64x300xf32>
    %6 = arith.addf %3, %5 : vector<64x300xf32>
    %cst_5 = arith.constant 0.000000e+00 : f32
    %7 = vector.broadcast %cst_5 : f32 to vector<64x300xf32>
    %8 = arith.maximumf %6, %7 : vector<64x300xf32>
    %9 = arith.truncf %8 : vector<64x300xf32> to vector<64x300xbf16>
    %c0_6 = arith.constant 0 : index
    %c0_7 = arith.constant 0 : index
    %10 = vector.load %arg6[%c0_6, %c0_7] : memref<64x300xbf16, #tpu.memory_space<vmem>>, vector<64x300xbf16>
    tpu.vector_store %arg6[%c0_6, %c0_7], %9 {strides = array<i32>} : memref<64x300xbf16, #tpu.memory_space<vmem>>, vector<64x300xbf16>,
    %11 = arith.truncf %8 : vector<64x300xf32> to vector<64x300xbf16>
    %c0_8 = arith.constant 0 : index
    %c0_9 = arith.constant 0 : index
    %12 = vector.load %arg4[%c0_8, %c0_9] : memref<300x300xbf16, #tpu.memory_space<vmem>>, vector<300x300xbf16>
    %cst_10 = arith.constant dense<0.000000e+00> : vector<64x300xf32>
    %13 = tpu.matmul %11, %12, %cst_10 {dimension_numbers = #tpu.dot_dimension_numbers<[1], [0], [0], [1], [0, 0, 1, 1], [], []>} : vector<64x300xbf16>, vector<300x300xbf16>, vector<64x300xf32> -> vector<64x300xf32>
    %c0_11 = arith.constant 0 : index
    %c0_12 = arith.constant 0 : index
    %14 = vector.load %arg5[%c0_11, %c0_12] : memref<1x300xf32, #tpu.memory_space<vmem>>, vector<1x300xf32>
    %15 = vector.broadcast %14 : vector<1x300xf32> to vector<64x300xf32>
    %16 = arith.addf %13, %15 : vector<64x300xf32>
    %cst_13 = arith.constant 0.000000e+00 : f32
    %17 = vector.broadcast %cst_13 : f32 to vector<64x300xf32>
    %18 = arith.maximumf %16, %17 : vector<64x300xf32>
    %19 = arith.truncf %18 : vector<64x300xf32> to vector<64x300xbf16>
    %c0_14 = arith.constant 0 : index
    %c0_15 = arith.constant 0 : index
    %20 = vector.load %arg7[%c0_14, %c0_15] : memref<64x300xbf16, #tpu.memory_space<vmem>>, vector<64x300xbf16>
    tpu.vector_store %arg7[%c0_14, %c0_15], %19 {strides = array<i32>} : memref<64x300xbf16, #tpu.memory_space<vmem>>, vector<64x300xbf16>,
    return
  }
  func.func @transform_0(%arg0: i32) -> (i32, i32) {
    %c0_i32 = arith.constant 0 : i32
    %c0_i32_0 = arith.constant 0 : i32
    return %arg0, %c0_i32 : i32, i32
  }
  func.func @transform_1(%arg0: i32) -> (i32, i32) {
    %c0_i32 = arith.constant 0 : i32
    %c0_i32_0 = arith.constant 0 : i32
    %c0_i32_1 = arith.constant 0 : i32
    return %c0_i32, %c0_i32_0 : i32, i32
  }
  func.func @transform_2(%arg0: i32) -> (i32, i32) {
    %c0_i32 = arith.constant 0 : i32
    %c0_i32_0 = arith.constant 0 : i32
    %c0_i32_1 = arith.constant 0 : i32
    return %c0_i32, %c0_i32_0 : i32, i32
  }
  func.func @transform_3(%arg0: i32) -> (i32, i32) {
    %c0_i32 = arith.constant 0 : i32
    %c0_i32_0 = arith.constant 0 : i32
    %c0_i32_1 = arith.constant 0 : i32
    return %c0_i32, %c0_i32_0 : i32, i32
  }
  func.func @transform_4(%arg0: i32) -> (i32, i32) {
    %c0_i32 = arith.constant 0 : i32
    %c0_i32_0 = arith.constant 0 : i32
    %c0_i32_1 = arith.constant 0 : i32
    return %c0_i32, %c0_i32_0 : i32, i32
  }
  func.func @transform_5(%arg0: i32) -> (i32, i32) {
    %c0_i32 = arith.constant 0 : i32
    %c0_i32_0 = arith.constant 0 : i32
    return %arg0, %c0_i32 : i32, i32
  }
  func.func @transform_6(%arg0: i32) -> (i32, i32) {
    %c0_i32 = arith.constant 0 : i32
    %c0_i32_0 = arith.constant 0 : i32
    return %arg0, %c0_i32 : i32, i32
  }
}

</mosaic_0001>

<llo_original>
// kernel: auto_encoder_forward.1
$region0: #{auto_encoder_forward.1}
  #allocation0 [shape = 'u32[]', space=smem, size = 0x4, offset = 0x4, fixed_abs, tag = 'smem constant byte address 0x4 - core index']
  #allocation1 [shape = 'u32[72,128]{1,0:T(1,128)}', space=vmem, size = 0x9000, scoped, tag = 'internal scratch']
  %s0 = inlined_call_operand.hbm [shape: f32[64,300], index: 0, kind: input, shape index: {}]
  %s1 = inlined_call_operand.hbm [shape: bf16[300,300], index: 1, kind: input, shape index: {}]
  %s2 = inlined_call_operand.hbm [shape: f32[1,300], index: 2, kind: input, shape index: {}]
  %s3 = inlined_call_operand.hbm [shape: bf16[300,300], index: 3, kind: input, shape index: {}]
  %s4 = inlined_call_operand.vmem [shape: f32[1,300], index: 4, kind: input, shape index: {}]
  %s5 = inlined_call_operand.hbm [shape: bf16[64,300], index: 5, kind: output, shape index: {0}]
  %s6 = inlined_call_operand.hbm [shape: bf16[64,300], index: 6, kind: output, shape index: {1}]
  %7 = xla_tuple %s5, %s6
  %s8 = sld [smem:[#allocation0]]
  $region54: #{auto_encoder_forward.1} parent=0
    _
  %s10 = ssub.s32 1, %s8
  %s11 = scalar_select 0, %s10, %s8
  $region1: #{auto_encoder_forward.1} parent=0
    #allocation2 [shape = 'u8[98304]{0}', space=vmem, size = 0x18000, scoped, tag = 'input window, operand 0, single buffered']
    #allocation3 [shape = 's32[1]{0}', space=sflag, size = 0x4, scoped, tag = 'scoped memory for auto_encoder_forward.1']
    #allocation4 [shape = 's32[1]{0}', space=sflag, size = 0x4, scoped, tag = 'scoped memory for auto_encoder_forward.1']
    #allocation5 [shape = 'u8[233472]{0}', space=vmem, size = 0x39000, scoped, tag = 'input window, operand 1, single buffered']
    #allocation6 [shape = 's32[1]{0}', space=sflag, size = 0x4, scoped, tag = 'scoped memory for auto_encoder_forward.1']
    #allocation7 [shape = 'u8[1536]{0}', space=vmem, size = 0x800, scoped, tag = 'input window, operand 2, single buffered']
    #allocation8 [shape = 'u8[233472]{0}', space=vmem, size = 0x39000, scoped, tag = 'input window, operand 3, single buffered']
    #allocation9 [shape = 's32[1]{0}', space=sflag, size = 0x4, scoped, tag = 'scoped memory for auto_encoder_forward.1']
    #allocation10 [shape = 'u8[49152]{0}', space=vmem, size = 0xc000, scoped, tag = 'output window, operand 0, single buffered']
    #allocation11 [shape = 'u8[49152]{0}', space=vmem, size = 0xc000, scoped, tag = 'output window, operand 1, single buffered']
    #allocation12 [shape = 's32[1]{0}', space=sflag, size = 0x4, scoped, tag = 'scoped memory for auto_encoder_forward.1']
    %12 = vsyncpa [#allocation3], 0
    %13 = vsyncpa [#allocation6], 0
    %14 = vsyncpa [#allocation9], 0
    %15 = vsyncpa [#allocation4], 0
    %16 = vsyncpa [#allocation12], 0
    // Predicated region
    $region2: #{auto_encoder_forward.1} parent=1 // pred_check
      _
    $region3: #{auto_encoder_forward.1} parent=1 // pred_check_branch
      %18 = sbr.rel (0) target = $region5
    $region4: #{auto_encoder_forward.1} parent=1 // pred_region
      %20 = vsyncadd [#allocation3], 0
      %s21 = sshll.u32 %s0, 4
      %s22 = int_to_ptr.hbm [resolvable:$true] %s21
      %s23 = sshll.u32 [#allocation2], 4
      %s24 = int_to_ptr.vmem [resolvable:$true] %s23
      %29 = dma.hbm_to_vmem [thread:$0]  %s22, 3072, %s24, [#allocation3], 384, 384, 24
    $region5: #{auto_encoder_forward.1} parent=1 // pred_fallthru
      _
    // Predicated region
    $region6: #{auto_encoder_forward.1} parent=1 // pred_check
      _
    $region7: #{auto_encoder_forward.1} parent=1 // pred_check_branch
      %31 = sbr.rel (0) target = $region9
    $region8: #{auto_encoder_forward.1} parent=1 // pred_region
      %33 = vsyncadd [#allocation6], 0
      %s34 = sshll.u32 %s1, 4
      %s35 = int_to_ptr.hbm [resolvable:$true] %s34
      %s36 = sshll.u32 [#allocation5], 4
      %s37 = int_to_ptr.vmem [resolvable:$true] %s36
      %42 = dma.hbm_to_vmem [thread:$0]  %s35, 7296, %s37, [#allocation6], 192, 192, 12
    $region9: #{auto_encoder_forward.1} parent=1 // pred_fallthru
      _
    // Predicated region
    $region10: #{auto_encoder_forward.1} parent=1 // pred_check
      _
    $region11: #{auto_encoder_forward.1} parent=1 // pred_check_branch
      %44 = sbr.rel (0) target = $region13
    $region12: #{auto_encoder_forward.1} parent=1 // pred_region
      %46 = vsyncadd [#allocation6], 0
      %s48 = sshll.u32 %s2, 4
      %s49 = int_to_ptr.hbm [resolvable:$true] %s48
      %s50 = sshll.u32 [#allocation7], 4
      %s51 = int_to_ptr.vmem [resolvable:$true] %s50
      %53 = dma.hbm_to_vmem [thread:$0]  %s49, 48, %s51, [#allocation6]
    $region13: #{auto_encoder_forward.1} parent=1 // pred_fallthru
      _
    // Predicated region
    $region14: #{auto_encoder_forward.1} parent=1 // pred_check
      _
    $region15: #{auto_encoder_forward.1} parent=1 // pred_check_branch
      %55 = sbr.rel (0) target = $region17
    $region16: #{auto_encoder_forward.1} parent=1 // pred_region
      %57 = vsyncadd [#allocation9], 0
      %s58 = sshll.u32 %s3, 4
      %s59 = int_to_ptr.hbm [resolvable:$true] %s58
      %s60 = sshll.u32 [#allocation8], 4
      %s61 = int_to_ptr.vmem [resolvable:$true] %s60
      %66 = dma.hbm_to_vmem [thread:$0]  %s59, 7296, %s61, [#allocation9], 192, 192, 12
    $region17: #{auto_encoder_forward.1} parent=1 // pred_fallthru
      _
    // Predicated region
    $region18: #{auto_encoder_forward.1} parent=1 // pred_check
      _
    $region19: #{auto_encoder_forward.1} parent=1 // pred_check_branch
      %68 = sbr.rel (0) target = $region21
    $region20: #{auto_encoder_forward.1} parent=1 // pred_region
      _
    $region21: #{auto_encoder_forward.1} parent=1 // pred_fallthru
      _
    // Predicated region
    $region22: #{auto_encoder_forward.1} parent=1 // pred_check
      _
    $region23: #{auto_encoder_forward.1} parent=1 // pred_check_branch
      %70 = sbr.rel (0) target = $region25
    $region24: #{auto_encoder_forward.1} parent=1 // pred_region
      %72 = dma.done [#allocation3], 3072
    $region25: #{auto_encoder_forward.1} parent=1 // pred_fallthru
      _
    // Predicated region
    $region26: #{auto_encoder_forward.1} parent=1 // pred_check
      _
    $region27: #{auto_encoder_forward.1} parent=1 // pred_check_branch
      %74 = sbr.rel (0) target = $region29
    $region28: #{auto_encoder_forward.1} parent=1 // pred_region
      %76 = dma.done [#allocation6], 7296
    $region29: #{auto_encoder_forward.1} parent=1 // pred_fallthru
      _
    // Predicated region
    $region30: #{auto_encoder_forward.1} parent=1 // pred_check
      _
    $region31: #{auto_encoder_forward.1} parent=1 // pred_check_branch
      %78 = sbr.rel (0) target = $region33
    $region32: #{auto_encoder_forward.1} parent=1 // pred_region
      %80 = dma.done [#allocation6], 48
    $region33: #{auto_encoder_forward.1} parent=1 // pred_fallthru
      _
    // Predicated region
    $region34: #{auto_encoder_forward.1} parent=1 // pred_check
      _
    $region35: #{auto_encoder_forward.1} parent=1 // pred_check_branch
      %82 = sbr.rel (0) target = $region37
    $region36: #{auto_encoder_forward.1} parent=1 // pred_region
      %84 = dma.done [#allocation9], 7296
    $region37: #{auto_encoder_forward.1} parent=1 // pred_fallthru
      _
    %v86 = vld [vmem:[#allocation2] sm:$0xff]
    %v87 = vld [vmem:[#allocation2 + $0x8] sm:$0xff]
    %v88 = vld [vmem:[#allocation2 + $0x10] sm:$0xff]
    %v89 = vld [vmem:[#allocation2 + $0x18] sm:$0xff]
    %v90 = vld [vmem:[#allocation2 + $0x20] sm:$0xff]
    %v91 = vld [vmem:[#allocation2 + $0x28] sm:$0xff]
    %v92 = vld [vmem:[#allocation2 + $0x30] sm:$0xff]
    %v93 = vld [vmem:[#allocation2 + $0x38] sm:$0xff]
    %v94 = vld [vmem:[#allocation2 + $0x40] sm:$0xff]
    %v95 = vld [vmem:[#allocation2 + $0x48] sm:$0xff]
    %v96 = vld [vmem:[#allocation2 + $0x50] sm:$0xff]
    %v97 = vld [vmem:[#allocation2 + $0x58] sm:$0xff]
    %v98 = vld [vmem:[#allocation2 + $0x60] sm:$0xff]
    %v99 = vld [vmem:[#allocation2 + $0x68] sm:$0xff]
    %v100 = vld [vmem:[#allocation2 + $0x70] sm:$0xff]
    %v101 = vld [vmem:[#allocation2 + $0x78] sm:$0xff]
    %v102 = vld [vmem:[#allocation2 + $0x80] sm:$0xff]
    %v103 = vld [vmem:[#allocation2 + $0x88] sm:$0xff]
    %v104 = vld [vmem:[#allocation2 + $0x90] sm:$0xff]
    %v105 = vld [vmem:[#allocation2 + $0x98] sm:$0xff]
    %v106 = vld [vmem:[#allocation2 + $0xa0] sm:$0xff]
    %v107 = vld [vmem:[#allocation2 + $0xa8] sm:$0xff]
    %v108 = vld [vmem:[#allocation2 + $0xb0] sm:$0xff]
    %v109 = vld [vmem:[#allocation2 + $0xb8] sm:$0xff]
    %v110 = vpack.c.bf16 %v89, %v86
    %v111 = vpack.c.bf16 %v90, %v87
    %v112 = vpack.c.bf16 %v91, %v88
    %v113 = vpack.c.bf16 %v95, %v92
    %v114 = vpack.c.bf16 %v96, %v93
    %v115 = vpack.c.bf16 %v97, %v94
    %v116 = vpack.c.bf16 %v101, %v98
    %v117 = vpack.c.bf16 %v102, %v99
    %v118 = vpack.c.bf16 %v103, %v100
    %v119 = vpack.c.bf16 %v107, %v104
    %v120 = vpack.c.bf16 %v108, %v105
    %v121 = vpack.c.bf16 %v109, %v106
    %v122 = vld [vmem:[#allocation5] sm:$0xff]
    %v123 = vld [vmem:[#allocation5 + $0x8] sm:$0xf]
    %v124 = vld [vmem:[#allocation5 + $0xc] sm:$0xff]
    %v125 = vld [vmem:[#allocation5 + $0x14] sm:$0xf]
    %v126 = vld [vmem:[#allocation5 + $0x18] sm:$0xff]
    %v127 = vld [vmem:[#allocation5 + $0x20] sm:$0xf]
    %v128 = vld [vmem:[#allocation5 + $0x24] sm:$0xff]
    %v129 = vld [vmem:[#allocation5 + $0x2c] sm:$0xf]
    %v130 = vld [vmem:[#allocation5 + $0x30] sm:$0xff]
    %v131 = vld [vmem:[#allocation5 + $0x38] sm:$0xf]
    %v132 = vld [vmem:[#allocation5 + $0x3c] sm:$0xff]
    %v133 = vld [vmem:[#allocation5 + $0x44] sm:$0xf]
    %v134 = vld [vmem:[#allocation5 + $0x48] sm:$0xff]
    %v135 = vld [vmem:[#allocation5 + $0x50] sm:$0xf]
    %v136 = vld [vmem:[#allocation5 + $0x54] sm:$0xff]
    %v137 = vld [vmem:[#allocation5 + $0x5c] sm:$0xf]
    %v138 = vld [vmem:[#allocation5 + $0x60] sm:$0xff]
    %v139 = vld [vmem:[#allocation5 + $0x68] sm:$0xf]
    %v140 = vld [vmem:[#allocation5 + $0x6c] sm:$0xff]
    %v141 = vld [vmem:[#allocation5 + $0x74] sm:$0xf]
    %v142 = vld [vmem:[#allocation5 + $0x78] sm:$0xff]
    %v143 = vld [vmem:[#allocation5 + $0x80] sm:$0xf]
    %v144 = vld [vmem:[#allocation5 + $0x84] sm:$0xff]
    %v145 = vld [vmem:[#allocation5 + $0x8c] sm:$0xf]
    %v146 = vld [vmem:[#allocation5 + $0x90] sm:$0xff]
    %v147 = vld [vmem:[#allocation5 + $0x98] sm:$0xf]
    %v148 = vld [vmem:[#allocation5 + $0x9c] sm:$0xff]
    %v149 = vld [vmem:[#allocation5 + $0xa4] sm:$0xf]
    %v150 = vld [vmem:[#allocation5 + $0xa8] sm:$0xff]
    %v151 = vld [vmem:[#allocation5 + $0xb0] sm:$0xf]
    %v152 = vld [vmem:[#allocation5 + $0xb4] sm:$0xff]
    %v153 = vld [vmem:[#allocation5 + $0xbc] sm:$0xf]
    %v154 = vld [vmem:[#allocation5 + $0xc0] sm:$0xff]
    %v155 = vld [vmem:[#allocation5 + $0xc8] sm:$0xf]
    %v156 = vld [vmem:[#allocation5 + $0xcc] sm:$0xff]
    %v157 = vld [vmem:[#allocation5 + $0xd4] sm:$0xf]
    %v158 = vld [vmem:[#allocation5 + $0xd8] sm:$0xff]
    %v159 = vld [vmem:[#allocation5 + $0xe0] sm:$0xf]
    %v160 = vld [vmem:[#allocation5 + $0xe4] sm:$0xff]
    %v161 = vld [vmem:[#allocation5 + $0xec] sm:$0xf]
    %v162 = vld [vmem:[#allocation5 + $0xf0] sm:$0xff]
    %v163 = vld [vmem:[#allocation5 + $0xf8] sm:$0xf]
    %v164 = vld [vmem:[#allocation5 + $0xfc] sm:$0xff]
    %v165 = vld [vmem:[#allocation5 + $0x104] sm:$0xf]
    %v166 = vld [vmem:[#allocation5 + $0x108] sm:$0xff]
    %v167 = vld [vmem:[#allocation5 + $0x110] sm:$0xf]
    %v168 = vld [vmem:[#allocation5 + $0x114] sm:$0xff]
    %v169 = vld [vmem:[#allocation5 + $0x11c] sm:$0xf]
    %v170 = vld [vmem:[#allocation5 + $0x120] sm:$0xff]
    %v171 = vld [vmem:[#allocation5 + $0x128] sm:$0xf]
    %v172 = vld [vmem:[#allocation5 + $0x12c] sm:$0xff]
    %v173 = vld [vmem:[#allocation5 + $0x134] sm:$0xf]
    %v174 = vld [vmem:[#allocation5 + $0x138] sm:$0xff]
    %v175 = vld [vmem:[#allocation5 + $0x140] sm:$0xf]
    %v176 = vld [vmem:[#allocation5 + $0x144] sm:$0xff]
    %v177 = vld [vmem:[#allocation5 + $0x14c] sm:$0xf]
    %v178 = vld [vmem:[#allocation5 + $0x150] sm:$0xff]
    %v179 = vld [vmem:[#allocation5 + $0x158] sm:$0xf]
    %v180 = vld [vmem:[#allocation5 + $0x15c] sm:$0xff]
    %v181 = vld [vmem:[#allocation5 + $0x164] sm:$0xf]
    %v182 = vld [vmem:[#allocation5 + $0x168] sm:$0xff]
    %v183 = vld [vmem:[#allocation5 + $0x170] sm:$0xf]
    %v184 = vld [vmem:[#allocation5 + $0x174] sm:$0xff]
    %v185 = vld [vmem:[#allocation5 + $0x17c] sm:$0xf]
    %v186 = vld [vmem:[#allocation5 + $0x180] sm:$0xff]
    %v187 = vld [vmem:[#allocation5 + $0x188] sm:$0xf]
    %v188 = vld [vmem:[#allocation5 + $0x18c] sm:$0xff]
    %v189 = vld [vmem:[#allocation5 + $0x194] sm:$0xf]
    %v190 = vld [vmem:[#allocation5 + $0x198] sm:$0xff]
    %v191 = vld [vmem:[#allocation5 + $0x1a0] sm:$0xf]
    %v192 = vld [vmem:[#allocation5 + $0x1a4] sm:$0xff]
    %v193 = vld [vmem:[#allocation5 + $0x1ac] sm:$0xf]
    %v194 = vld [vmem:[#allocation5 + $0x1b0] sm:$0xff]
    %v195 = vld [vmem:[#allocation5 + $0x1b8] sm:$0xf]
    %v196 = vld [vmem:[#allocation5 + $0x1bc] sm:$0x33]
    %v197 = vld [vmem:[#allocation5 + $0x1c4] sm:$0x3]
    %v198 = vld [vmem:[#allocation7] sm:$0x7]
    %v200 = vperm.slane %v198, 0
    %v201 = vperm.slane %v198, 1
    %v202 = vperm.slane %v198, 2
    %v282 = vunpack.c.l.b16 %v122
    %v283 = vunpack.c.h.b16 %v122
    %v284 = vunpack.c.l.b16 %v123
    %v285 = vunpack.c.l.b16 %v124
    %v286 = vunpack.c.h.b16 %v124
    %v287 = vunpack.c.l.b16 %v125
    %v288 = vunpack.c.l.b16 %v126
    %v289 = vunpack.c.h.b16 %v126
    %v290 = vunpack.c.l.b16 %v127
    %v291 = vunpack.c.l.b16 %v128
    %v292 = vunpack.c.h.b16 %v128
    %v293 = vunpack.c.l.b16 %v129
    %v294 = vunpack.c.l.b16 %v130
    %v295 = vunpack.c.h.b16 %v130
    %v296 = vunpack.c.l.b16 %v131
    %v297 = vunpack.c.l.b16 %v132
    %v298 = vunpack.c.h.b16 %v132
    %v299 = vunpack.c.l.b16 %v133
    %v300 = vunpack.c.l.b16 %v134
    %v301 = vunpack.c.h.b16 %v134
    %v302 = vunpack.c.l.b16 %v135
    %v303 = vunpack.c.l.b16 %v136
    %v304 = vunpack.c.h.b16 %v136
    %v305 = vunpack.c.l.b16 %v137
    %v306 = vunpack.c.l.b16 %v138
    %v307 = vunpack.c.h.b16 %v138
    %v308 = vunpack.c.l.b16 %v139
    %v309 = vunpack.c.l.b16 %v140
    %v310 = vunpack.c.h.b16 %v140
    %v311 = vunpack.c.l.b16 %v141
    %v312 = vunpack.c.l.b16 %v142
    %v313 = vunpack.c.h.b16 %v142
    %v314 = vunpack.c.l.b16 %v143
    %v315 = vunpack.c.l.b16 %v144
    %v316 = vunpack.c.h.b16 %v144
    %v317 = vunpack.c.l.b16 %v145
    %v318 = vunpack.c.l.b16 %v146
    %v319 = vunpack.c.h.b16 %v146
    %v320 = vunpack.c.l.b16 %v147
    %v321 = vunpack.c.l.b16 %v148
    %v322 = vunpack.c.h.b16 %v148
    %v323 = vunpack.c.l.b16 %v149
    %v324 = vunpack.c.l.b16 %v150
    %v325 = vunpack.c.h.b16 %v150
    %v326 = vunpack.c.l.b16 %v151
    %v327 = vunpack.c.l.b16 %v152
    %v328 = vunpack.c.h.b16 %v152
    %v329 = vunpack.c.l.b16 %v153
    %v330 = vunpack.c.l.b16 %v154
    %v331 = vunpack.c.h.b16 %v154
    %v332 = vunpack.c.l.b16 %v155
    %v333 = vunpack.c.l.b16 %v156
    %v334 = vunpack.c.h.b16 %v156
    %v335 = vunpack.c.l.b16 %v157
    %v336 = vunpack.c.l.b16 %v158
    %v337 = vunpack.c.h.b16 %v158
    %v338 = vunpack.c.l.b16 %v159
    %v339 = vunpack.c.l.b16 %v160
    %v340 = vunpack.c.h.b16 %v160
    %v341 = vunpack.c.l.b16 %v161
    %v342 = vunpack.c.l.b16 %v162
    %v343 = vunpack.c.h.b16 %v162
    %v344 = vunpack.c.l.b16 %v163
    %v345 = vunpack.c.l.b16 %v164
    %v346 = vunpack.c.h.b16 %v164
    %v347 = vunpack.c.l.b16 %v165
    %v348 = vunpack.c.l.b16 %v166
    %v349 = vunpack.c.h.b16 %v166
    %v350 = vunpack.c.l.b16 %v167
    %v351 = vunpack.c.l.b16 %v168
    %v352 = vunpack.c.h.b16 %v168
    %v353 = vunpack.c.l.b16 %v169
    %v354 = vunpack.c.l.b16 %v170
    %v355 = vunpack.c.h.b16 %v170
    %v356 = vunpack.c.l.b16 %v171
    %v357 = vunpack.c.l.b16 %v172
    %v358 = vunpack.c.h.b16 %v172
    %v359 = vunpack.c.l.b16 %v173
    %v360 = vunpack.c.l.b16 %v174
    %v361 = vunpack.c.h.b16 %v174
    %v362 = vunpack.c.l.b16 %v175
    %v363 = vunpack.c.l.b16 %v176
    %v364 = vunpack.c.h.b16 %v176
    %v365 = vunpack.c.l.b16 %v177
    %v366 = vunpack.c.l.b16 %v178
    %v367 = vunpack.c.h.b16 %v178
    %v368 = vunpack.c.l.b16 %v179
    %v369 = vunpack.c.l.b16 %v180
    %v370 = vunpack.c.h.b16 %v180
    %v371 = vunpack.c.l.b16 %v181
    %v372 = vunpack.c.l.b16 %v182
    %v373 = vunpack.c.h.b16 %v182
    %v374 = vunpack.c.l.b16 %v183
    %v375 = vunpack.c.l.b16 %v184
    %v376 = vunpack.c.h.b16 %v184
    %v377 = vunpack.c.l.b16 %v185
    %v378 = vunpack.c.l.b16 %v186
    %v379 = vunpack.c.h.b16 %v186
    %v380 = vunpack.c.l.b16 %v187
    %v381 = vunpack.c.l.b16 %v188
    %v382 = vunpack.c.h.b16 %v188
    %v383 = vunpack.c.l.b16 %v189
    %v384 = vunpack.c.l.b16 %v190
    %v385 = vunpack.c.h.b16 %v190
    %v386 = vunpack.c.l.b16 %v191
    %v387 = vunpack.c.l.b16 %v192
    %v388 = vunpack.c.h.b16 %v192
    %v389 = vunpack.c.l.b16 %v193
    %v390 = vunpack.c.l.b16 %v194
    %v391 = vunpack.c.h.b16 %v194
    %v392 = vunpack.c.l.b16 %v195
    %v393 = vunpack.c.l.b16 %v196
    %v394 = vunpack.c.h.b16 %v196
    %v395 = vunpack.c.l.b16 %v197
    %v396 = vpack.c.b16 %v285, %v282
    %v397 = vpack.c.b16 %v286, %v283
    %v398 = vpack.c.b16 %v287, %v284
    %v399 = vpack.c.b16 %v291, %v288
    %v400 = vpack.c.b16 %v292, %v289
    %v401 = vpack.c.b16 %v293, %v290
    %v402 = vpack.c.b16 %v297, %v294
    %v403 = vpack.c.b16 %v298, %v295
    %v404 = vpack.c.b16 %v299, %v296
    %v405 = vpack.c.b16 %v303, %v300
    %v406 = vpack.c.b16 %v304, %v301
    %v407 = vpack.c.b16 %v305, %v302
    %v408 = vpack.c.b16 %v309, %v306
    %v409 = vpack.c.b16 %v310, %v307
    %v410 = vpack.c.b16 %v311, %v308
    %v411 = vpack.c.b16 %v315, %v312
    %v412 = vpack.c.b16 %v316, %v313
    %v413 = vpack.c.b16 %v317, %v314
    %v414 = vpack.c.b16 %v321, %v318
    %v415 = vpack.c.b16 %v322, %v319
    %v416 = vpack.c.b16 %v323, %v320
    %v417 = vpack.c.b16 %v327, %v324
    %v418 = vpack.c.b16 %v328, %v325
    %v419 = vpack.c.b16 %v329, %v326
    %v420 = vpack.c.b16 %v333, %v330
    %v421 = vpack.c.b16 %v334, %v331
    %v422 = vpack.c.b16 %v335, %v332
    %v423 = vpack.c.b16 %v339, %v336
    %v424 = vpack.c.b16 %v340, %v337
    %v425 = vpack.c.b16 %v341, %v338
    %v426 = vpack.c.b16 %v345, %v342
    %v427 = vpack.c.b16 %v346, %v343
    %v428 = vpack.c.b16 %v347, %v344
    %v429 = vpack.c.b16 %v351, %v348
    %v430 = vpack.c.b16 %v352, %v349
    %v431 = vpack.c.b16 %v353, %v350
    %v432 = vpack.c.b16 %v357, %v354
    %v433 = vpack.c.b16 %v358, %v355
    %v434 = vpack.c.b16 %v359, %v356
    %v435 = vpack.c.b16 %v363, %v360
    %v436 = vpack.c.b16 %v364, %v361
    %v437 = vpack.c.b16 %v365, %v362
    %v438 = vpack.c.b16 %v369, %v366
    %v439 = vpack.c.b16 %v370, %v367
    %v440 = vpack.c.b16 %v371, %v368
    %v441 = vpack.c.b16 %v375, %v372
    %v442 = vpack.c.b16 %v376, %v373
    %v443 = vpack.c.b16 %v377, %v374
    %v444 = vpack.c.b16 %v381, %v378
    %v445 = vpack.c.b16 %v382, %v379
    %v446 = vpack.c.b16 %v383, %v380
    %v447 = vpack.c.b16 %v387, %v384
    %v448 = vpack.c.b16 %v388, %v385
    %v449 = vpack.c.b16 %v389, %v386
    %v450 = vpack.c.b16 %v393, %v390
    %v451 = vpack.c.b16 %v394, %v391
    %v452 = vpack.c.b16 %v395, %v392
    %vm507 = vcmask 359424
    %v509 = vsel %vm507, %v112, 0
    %v512 = vsel %vm507, %v115, 0
    %v515 = vsel %vm507, %v118, 0
    %v518 = vsel %vm507, %v121, 0
    %vm520 = vcmask 1045504
    %v522 = vsel %vm520, %v450, 0
    %v525 = vsel %vm520, %v451, 0
    %v528 = vsel %vm520, %v452, 0
    %530 = vmatpush.bf16.msra.mxu0 %v417
    %531 = vmatpush.bf16.msra.mxu0 %v414
    %532 = vmatpush.bf16.msra.mxu0 %v411
    %533 = vmatpush.bf16.msra.mxu0 %v408
    %534 = vmatpush.bf16.msra.mxu0 %v405
    %535 = vmatpush.bf16.msra.mxu0 %v402
    %536 = vmatpush.bf16.msra.mxu0 %v399
    %537 = vmatpush.bf16.msra.mxu0 %v396
    %538 = vmatmul.bf16.gmra.mxu0 %v110
    %v539 = vpop.f32.mrf.mxu0
    %v540 = vadd.f32 %v200, %v539
    %v541 = vpop.f32.mrf.mxu0
    %v542 = vadd.f32 %v200, %v541
    %543 = vmatmul.bf16.gmra.mxu0 %v113
    %v544 = vpop.f32.mrf.mxu0
    %v545 = vadd.f32 %v200, %v544
    %v546 = vpop.f32.mrf.mxu0
    %v547 = vadd.f32 %v200, %v546
    %548 = vmatmul.bf16.gmra.mxu0 %v116
    %v549 = vpop.f32.mrf.mxu0
    %v550 = vadd.f32 %v200, %v549
    %v551 = vpop.f32.mrf.mxu0
    %v552 = vadd.f32 %v200, %v551
    %553 = vmatmul.bf16.gmra.mxu0 %v119
    %v554 = vpop.f32.mrf.mxu0
    %v555 = vadd.f32 %v200, %v554
    %v556 = vpop.f32.mrf.mxu0
    %v557 = vadd.f32 %v200, %v556
    %558 = vdwg.mxu0
    %559 = vmatpush.bf16.msra.mxu0 %v441
    %560 = vmatpush.bf16.msra.mxu0 %v438
    %561 = vmatpush.bf16.msra.mxu0 %v435
    %562 = vmatpush.bf16.msra.mxu0 %v432
    %563 = vmatpush.bf16.msra.mxu0 %v429
    %564 = vmatpush.bf16.msra.mxu0 %v426
    %565 = vmatpush.bf16.msra.mxu0 %v423
    %566 = vmatpush.bf16.msra.mxu0 %v420
    %567 = vmatmul.bf16.gmra.mxu0 %v111
    %v568 = vpop.f32.mrf.mxu0
    %v569 = vadd.f32 %v540, %v568
    %v570 = vpop.f32.mrf.mxu0
    %v571 = vadd.f32 %v542, %v570
    %572 = vmatmul.bf16.gmra.mxu0 %v114
    %v573 = vpop.f32.mrf.mxu0
    %v574 = vadd.f32 %v545, %v573
    %v575 = vpop.f32.mrf.mxu0
    %v576 = vadd.f32 %v547, %v575
    %577 = vmatmul.bf16.gmra.mxu0 %v117
    %v578 = vpop.f32.mrf.mxu0
    %v579 = vadd.f32 %v550, %v578
    %v580 = vpop.f32.mrf.mxu0
    %v581 = vadd.f32 %v552, %v580
    %582 = vmatmul.bf16.gmra.mxu0 %v120
    %v583 = vpop.f32.mrf.mxu0
    %v584 = vadd.f32 %v555, %v583
    %v585 = vpop.f32.mrf.mxu0
    %v586 = vadd.f32 %v557, %v585
    %587 = vdwg.mxu0
    %588 = vmatpush.bf16.msra.mxu0 0
    %589 = vmatpush.bf16.msra.mxu0 0
    %590 = vmatpush.bf16.msra.mxu0 0
    %591 = vmatpush.bf16.msra.mxu0 0
    %592 = vmatpush.bf16.msra.mxu0 0
    %593 = vmatpush.bf16.msra.mxu0 %v522
    %594 = vmatpush.bf16.msra.mxu0 %v447
    %595 = vmatpush.bf16.msra.mxu0 %v444
    %596 = vmatmul.bf16.gmra.mxu0 %v509
    %v597 = vpop.f32.mrf.mxu0
    %v598 = vadd.f32 %v569, %v597
    %v599 = vpop.f32.mrf.mxu0
    %v600 = vadd.f32 %v571, %v599
    %601 = vmatmul.bf16.gmra.mxu0 %v512
    %v602 = vpop.f32.mrf.mxu0
    %v603 = vadd.f32 %v574, %v602
    %v604 = vpop.f32.mrf.mxu0
    %v605 = vadd.f32 %v576, %v604
    %606 = vmatmul.bf16.gmra.mxu0 %v515
    %v607 = vpop.f32.mrf.mxu0
    %v608 = vadd.f32 %v579, %v607
    %v609 = vpop.f32.mrf.mxu0
    %v610 = vadd.f32 %v581, %v609
    %611 = vmatmul.bf16.gmra.mxu0 %v518
    %v612 = vpop.f32.mrf.mxu0
    %v613 = vadd.f32 %v584, %v612
    %v614 = vpop.f32.mrf.mxu0
    %v615 = vadd.f32 %v586, %v614
    %616 = vdwg.mxu0
    %617 = vmatpush.bf16.msra.mxu0 %v418
    %618 = vmatpush.bf16.msra.mxu0 %v415
    %619 = vmatpush.bf16.msra.mxu0 %v412
    %620 = vmatpush.bf16.msra.mxu0 %v409
    %621 = vmatpush.bf16.msra.mxu0 %v406
    %622 = vmatpush.bf16.msra.mxu0 %v403
    %623 = vmatpush.bf16.msra.mxu0 %v400
    %624 = vmatpush.bf16.msra.mxu0 %v397
    %625 = vmatmul.bf16.gmra.mxu0 %v110
    %v626 = vpop.f32.mrf.mxu0
    %v627 = vadd.f32 %v201, %v626
    %v628 = vpop.f32.mrf.mxu0
    %v629 = vadd.f32 %v201, %v628
    %630 = vmatmul.bf16.gmra.mxu0 %v113
    %v631 = vpop.f32.mrf.mxu0
    %v632 = vadd.f32 %v201, %v631
    %v633 = vpop.f32.mrf.mxu0
    %v634 = vadd.f32 %v201, %v633
    %635 = vmatmul.bf16.gmra.mxu0 %v116
    %v636 = vpop.f32.mrf.mxu0
    %v637 = vadd.f32 %v201, %v636
    %v638 = vpop.f32.mrf.mxu0
    %v639 = vadd.f32 %v201, %v638
    %640 = vmatmul.bf16.gmra.mxu0 %v119
    %v641 = vpop.f32.mrf.mxu0
    %v642 = vadd.f32 %v201, %v641
    %v643 = vpop.f32.mrf.mxu0
    %v644 = vadd.f32 %v201, %v643
    %645 = vdwg.mxu0
    %646 = vmatpush.bf16.msra.mxu0 %v442
    %647 = vmatpush.bf16.msra.mxu0 %v439
    %648 = vmatpush.bf16.msra.mxu0 %v436
    %649 = vmatpush.bf16.msra.mxu0 %v433
    %650 = vmatpush.bf16.msra.mxu0 %v430
    %651 = vmatpush.bf16.msra.mxu0 %v427
    %652 = vmatpush.bf16.msra.mxu0 %v424
    %653 = vmatpush.bf16.msra.mxu0 %v421
    %654 = vmatmul.bf16.gmra.mxu0 %v111
    %v655 = vpop.f32.mrf.mxu0
    %v656 = vadd.f32 %v627, %v655
    %v657 = vpop.f32.mrf.mxu0
    %v658 = vadd.f32 %v629, %v657
    %659 = vmatmul.bf16.gmra.mxu0 %v114
    %v660 = vpop.f32.mrf.mxu0
    %v661 = vadd.f32 %v632, %v660
    %v662 = vpop.f32.mrf.mxu0
    %v663 = vadd.f32 %v634, %v662
    %664 = vmatmul.bf16.gmra.mxu0 %v117
    %v665 = vpop.f32.mrf.mxu0
    %v666 = vadd.f32 %v637, %v665
    %v667 = vpop.f32.mrf.mxu0
    %v668 = vadd.f32 %v639, %v667
    %669 = vmatmul.bf16.gmra.mxu0 %v120
    %v670 = vpop.f32.mrf.mxu0
    %v671 = vadd.f32 %v642, %v670
    %v672 = vpop.f32.mrf.mxu0
    %v673 = vadd.f32 %v644, %v672
    %674 = vdwg.mxu0
    %675 = vmatpush.bf16.msra.mxu0 0
    %676 = vmatpush.bf16.msra.mxu0 0
    %677 = vmatpush.bf16.msra.mxu0 0
    %678 = vmatpush.bf16.msra.mxu0 0
    %679 = vmatpush.bf16.msra.mxu0 0
    %680 = vmatpush.bf16.msra.mxu0 %v525
    %681 = vmatpush.bf16.msra.mxu0 %v448
    %682 = vmatpush.bf16.msra.mxu0 %v445
    %683 = vmatmul.bf16.gmra.mxu0 %v509
    %v684 = vpop.f32.mrf.mxu0
    %v685 = vadd.f32 %v656, %v684
    %v686 = vpop.f32.mrf.mxu0
    %v687 = vadd.f32 %v658, %v686
    %688 = vmatmul.bf16.gmra.mxu0 %v512
    %v689 = vpop.f32.mrf.mxu0
    %v690 = vadd.f32 %v661, %v689
    %v691 = vpop.f32.mrf.mxu0
    %v692 = vadd.f32 %v663, %v691
    %693 = vmatmul.bf16.gmra.mxu0 %v515
    %v694 = vpop.f32.mrf.mxu0
    %v695 = vadd.f32 %v666, %v694
    %v696 = vpop.f32.mrf.mxu0
    %v697 = vadd.f32 %v668, %v696
    %698 = vmatmul.bf16.gmra.mxu0 %v518
    %v699 = vpop.f32.mrf.mxu0
    %v700 = vadd.f32 %v671, %v699
    %v701 = vpop.f32.mrf.mxu0
    %v702 = vadd.f32 %v673, %v701
    %703 = vdwg.mxu0
    %704 = vmatpush.bf16.msra.mxu0 %v419
    %705 = vmatpush.bf16.msra.mxu0 %v416
    %706 = vmatpush.bf16.msra.mxu0 %v413
    %707 = vmatpush.bf16.msra.mxu0 %v410
    %708 = vmatpush.bf16.msra.mxu0 %v407
    %709 = vmatpush.bf16.msra.mxu0 %v404
    %710 = vmatpush.bf16.msra.mxu0 %v401
    %711 = vmatpush.bf16.msra.mxu0 %v398
    %712 = vmatmul.bf16.gmra.mxu0 %v110
    %v713 = vpop.f32.mrf.mxu0
    %v714 = vadd.f32 %v202, %v713
    %v715 = vpop.f32.mrf.mxu0
    %v716 = vadd.f32 %v202, %v715
    %717 = vmatmul.bf16.gmra.mxu0 %v113
    %v718 = vpop.f32.mrf.mxu0
    %v719 = vadd.f32 %v202, %v718
    %v720 = vpop.f32.mrf.mxu0
    %v721 = vadd.f32 %v202, %v720
    %722 = vmatmul.bf16.gmra.mxu0 %v116
    %v723 = vpop.f32.mrf.mxu0
    %v724 = vadd.f32 %v202, %v723
    %v725 = vpop.f32.mrf.mxu0
    %v726 = vadd.f32 %v202, %v725
    %727 = vmatmul.bf16.gmra.mxu0 %v119
    %v728 = vpop.f32.mrf.mxu0
    %v729 = vadd.f32 %v202, %v728
    %v730 = vpop.f32.mrf.mxu0
    %v731 = vadd.f32 %v202, %v730
    %732 = vdwg.mxu0
    %733 = vmatpush.bf16.msra.mxu0 %v443
    %734 = vmatpush.bf16.msra.mxu0 %v440
    %735 = vmatpush.bf16.msra.mxu0 %v437
    %736 = vmatpush.bf16.msra.mxu0 %v434
    %737 = vmatpush.bf16.msra.mxu0 %v431
    %738 = vmatpush.bf16.msra.mxu0 %v428
    %739 = vmatpush.bf16.msra.mxu0 %v425
    %740 = vmatpush.bf16.msra.mxu0 %v422
    %741 = vmatmul.bf16.gmra.mxu0 %v111
    %v742 = vpop.f32.mrf.mxu0
    %v743 = vadd.f32 %v714, %v742
    %v744 = vpop.f32.mrf.mxu0
    %v745 = vadd.f32 %v716, %v744
    %746 = vmatmul.bf16.gmra.mxu0 %v114
    %v747 = vpop.f32.mrf.mxu0
    %v748 = vadd.f32 %v719, %v747
    %v749 = vpop.f32.mrf.mxu0
    %v750 = vadd.f32 %v721, %v749
    %751 = vmatmul.bf16.gmra.mxu0 %v117
    %v752 = vpop.f32.mrf.mxu0
    %v753 = vadd.f32 %v724, %v752
    %v754 = vpop.f32.mrf.mxu0
    %v755 = vadd.f32 %v726, %v754
    %756 = vmatmul.bf16.gmra.mxu0 %v120
    %v757 = vpop.f32.mrf.mxu0
    %v758 = vadd.f32 %v729, %v757
    %v759 = vpop.f32.mrf.mxu0
    %v760 = vadd.f32 %v731, %v759
    %761 = vdwg.mxu0
    %762 = vmatpush.bf16.msra.mxu0 0
    %763 = vmatpush.bf16.msra.mxu0 0
    %764 = vmatpush.bf16.msra.mxu0 0
    %765 = vmatpush.bf16.msra.mxu0 0
    %766 = vmatpush.bf16.msra.mxu0 0
    %767 = vmatpush.bf16.msra.mxu0 %v528
    %768 = vmatpush.bf16.msra.mxu0 %v449
    %769 = vmatpush.bf16.msra.mxu0 %v446
    %770 = vmatmul.bf16.gmra.mxu0 %v509
    %v771 = vpop.f32.mrf.mxu0
    %v772 = vadd.f32 %v743, %v771
    %v773 = vpop.f32.mrf.mxu0
    %v774 = vadd.f32 %v745, %v773
    %775 = vmatmul.bf16.gmra.mxu0 %v512
    %v776 = vpop.f32.mrf.mxu0
    %v777 = vadd.f32 %v748, %v776
    %v778 = vpop.f32.mrf.mxu0
    %v779 = vadd.f32 %v750, %v778
    %780 = vmatmul.bf16.gmra.mxu0 %v515
    %v781 = vpop.f32.mrf.mxu0
    %v782 = vadd.f32 %v753, %v781
    %v783 = vpop.f32.mrf.mxu0
    %v784 = vadd.f32 %v755, %v783
    %785 = vmatmul.bf16.gmra.mxu0 %v518
    %v786 = vpop.f32.mrf.mxu0
    %v787 = vadd.f32 %v758, %v786
    %v788 = vpop.f32.mrf.mxu0
    %v789 = vadd.f32 %v760, %v788
    %790 = vdwg.mxu0
    %v791 = vmax.f32 %v598, 0.0
    %v792 = vmax.f32 %v685, 0.0
    %v793 = vmax.f32 %v772, 0.0
    %v794 = vmax.f32 %v600, 0.0
    %v795 = vmax.f32 %v687, 0.0
    %v796 = vmax.f32 %v774, 0.0
    %v797 = vmax.f32 %v603, 0.0
    %v798 = vmax.f32 %v690, 0.0
    %v799 = vmax.f32 %v777, 0.0
    %v800 = vmax.f32 %v605, 0.0
    %v801 = vmax.f32 %v692, 0.0
    %v802 = vmax.f32 %v779, 0.0
    %v803 = vmax.f32 %v608, 0.0
    %v804 = vmax.f32 %v695, 0.0
    %v805 = vmax.f32 %v782, 0.0
    %v806 = vmax.f32 %v610, 0.0
    %v807 = vmax.f32 %v697, 0.0
    %v808 = vmax.f32 %v784, 0.0
    %v809 = vmax.f32 %v613, 0.0
    %v810 = vmax.f32 %v700, 0.0
    %v811 = vmax.f32 %v787, 0.0
    %v812 = vmax.f32 %v615, 0.0
    %v813 = vmax.f32 %v702, 0.0
    %v814 = vmax.f32 %v789, 0.0
    %v815 = vpack.c.bf16 %v792, %v791
    %v816 = vpack.c.bf16 %v793, %v793
    %v817 = vpack.c.bf16 %v795, %v794
    %v818 = vpack.c.bf16 %v796, %v796
    %v819 = vpack.c.bf16 %v798, %v797
    %v820 = vpack.c.bf16 %v799, %v799
    %v821 = vpack.c.bf16 %v801, %v800
    %v822 = vpack.c.bf16 %v802, %v802
    %v823 = vpack.c.bf16 %v804, %v803
    %v824 = vpack.c.bf16 %v805, %v805
    %v825 = vpack.c.bf16 %v807, %v806
    %v826 = vpack.c.bf16 %v808, %v808
    %v827 = vpack.c.bf16 %v810, %v809
    %v828 = vpack.c.bf16 %v811, %v811
    %v829 = vpack.c.bf16 %v813, %v812
    %v830 = vpack.c.bf16 %v814, %v814
    %831 = vst [vmem:[#allocation10] sm:$0xff] %v815
    %vm832 = vcmask 355328
    %833 = vst.msk [vmem:[#allocation10 + $0x8] sm:$0xf] %vm832, %v816
    %834 = vst [vmem:[#allocation10 + $0xc] sm:$0xff] %v817
    %835 = vst.msk [vmem:[#allocation10 + $0x14] sm:$0xf] %vm832, %v818
    %836 = vst [vmem:[#allocation10 + $0x18] sm:$0xff] %v819
    %837 = vst.msk [vmem:[#allocation10 + $0x20] sm:$0xf] %vm832, %v820
    %838 = vst [vmem:[#allocation10 + $0x24] sm:$0xff] %v821
    %839 = vst.msk [vmem:[#allocation10 + $0x2c] sm:$0xf] %vm832, %v822
    %840 = vst [vmem:[#allocation10 + $0x30] sm:$0xff] %v823
    %841 = vst.msk [vmem:[#allocation10 + $0x38] sm:$0xf] %vm832, %v824
    %842 = vst [vmem:[#allocation10 + $0x3c] sm:$0xff] %v825
    %843 = vst.msk [vmem:[#allocation10 + $0x44] sm:$0xf] %vm832, %v826
    %844 = vst [vmem:[#allocation10 + $0x48] sm:$0xff] %v827
    %845 = vst.msk [vmem:[#allocation10 + $0x50] sm:$0xf] %vm832, %v828
    %846 = vst [vmem:[#allocation10 + $0x54] sm:$0xff] %v829
    %847 = vst.msk [vmem:[#allocation10 + $0x5c] sm:$0xf] %vm832, %v830
    %v848 = vld [vmem:[#allocation8] sm:$0xff]
    %v849 = vld [vmem:[#allocation8 + $0x8] sm:$0xf]
    %v850 = vld [vmem:[#allocation8 + $0xc] sm:$0xff]
    %v851 = vld [vmem:[#allocation8 + $0x14] sm:$0xf]
    %v852 = vld [vmem:[#allocation8 + $0x18] sm:$0xff]
    %v853 = vld [vmem:[#allocation8 + $0x20] sm:$0xf]
    %v854 = vld [vmem:[#allocation8 + $0x24] sm:$0xff]
    %v855 = vld [vmem:[#allocation8 + $0x2c] sm:$0xf]
    %v856 = vld [vmem:[#allocation8 + $0x30] sm:$0xff]
    %v857 = vld [vmem:[#allocation8 + $0x38] sm:$0xf]
    %v858 = vld [vmem:[#allocation8 + $0x3c] sm:$0xff]
    %v859 = vld [vmem:[#allocation8 + $0x44] sm:$0xf]
    %v860 = vld [vmem:[#allocation8 + $0x48] sm:$0xff]
    %v861 = vld [vmem:[#allocation8 + $0x50] sm:$0xf]
    %v862 = vld [vmem:[#allocation8 + $0x54] sm:$0xff]
    %v863 = vld [vmem:[#allocation8 + $0x5c] sm:$0xf]
    %v864 = vld [vmem:[#allocation8 + $0x60] sm:$0xff]
    %v865 = vld [vmem:[#allocation8 + $0x68] sm:$0xf]
    %v866 = vld [vmem:[#allocation8 + $0x6c] sm:$0xff]
    %v867 = vld [vmem:[#allocation8 + $0x74] sm:$0xf]
    %v868 = vld [vmem:[#allocation8 + $0x78] sm:$0xff]
    %v869 = vld [vmem:[#allocation8 + $0x80] sm:$0xf]
    %v870 = vld [vmem:[#allocation8 + $0x84] sm:$0xff]
    %v871 = vld [vmem:[#allocation8 + $0x8c] sm:$0xf]
    %v872 = vld [vmem:[#allocation8 + $0x90] sm:$0xff]
    %v873 = vld [vmem:[#allocation8 + $0x98] sm:$0xf]
    %v874 = vld [vmem:[#allocation8 + $0x9c] sm:$0xff]
    %v875 = vld [vmem:[#allocation8 + $0xa4] sm:$0xf]
    %v876 = vld [vmem:[#allocation8 + $0xa8] sm:$0xff]
    %v877 = vld [vmem:[#allocation8 + $0xb0] sm:$0xf]
    %v878 = vld [vmem:[#allocation8 + $0xb4] sm:$0xff]
    %v879 = vld [vmem:[#allocation8 + $0xbc] sm:$0xf]
    %v880 = vld [vmem:[#allocation8 + $0xc0] sm:$0xff]
    %v881 = vld [vmem:[#allocation8 + $0xc8] sm:$0xf]
    %v882 = vld [vmem:[#allocation8 + $0xcc] sm:$0xff]
    %v883 = vld [vmem:[#allocation8 + $0xd4] sm:$0xf]
    %v884 = vld [vmem:[#allocation8 + $0xd8] sm:$0xff]
    %v885 = vld [vmem:[#allocation8 + $0xe0] sm:$0xf]
    %v886 = vld [vmem:[#allocation8 + $0xe4] sm:$0xff]
    %v887 = vld [vmem:[#allocation8 + $0xec] sm:$0xf]
    %v888 = vld [vmem:[#allocation8 + $0xf0] sm:$0xff]
    %v889 = vld [vmem:[#allocation8 + $0xf8] sm:$0xf]
    %v890 = vld [vmem:[#allocation8 + $0xfc] sm:$0xff]
    %v891 = vld [vmem:[#allocation8 + $0x104] sm:$0xf]
    %v892 = vld [vmem:[#allocation8 + $0x108] sm:$0xff]
    %v893 = vld [vmem:[#allocation8 + $0x110] sm:$0xf]
    %v894 = vld [vmem:[#allocation8 + $0x114] sm:$0xff]
    %v895 = vld [vmem:[#allocation8 + $0x11c] sm:$0xf]
    %v896 = vld [vmem:[#allocation8 + $0x120] sm:$0xff]
    %v897 = vld [vmem:[#allocation8 + $0x128] sm:$0xf]
    %v898 = vld [vmem:[#allocation8 + $0x12c] sm:$0xff]
    %v899 = vld [vmem:[#allocation8 + $0x134] sm:$0xf]
    %v900 = vld [vmem:[#allocation8 + $0x138] sm:$0xff]
    %v901 = vld [vmem:[#allocation8 + $0x140] sm:$0xf]
    %v902 = vld [vmem:[#allocation8 + $0x144] sm:$0xff]
    %v903 = vld [vmem:[#allocation8 + $0x14c] sm:$0xf]
    %v904 = vld [vmem:[#allocation8 + $0x150] sm:$0xff]
    %v905 = vld [vmem:[#allocation8 + $0x158] sm:$0xf]
    %v906 = vld [vmem:[#allocation8 + $0x15c] sm:$0xff]
    %v907 = vld [vmem:[#allocation8 + $0x164] sm:$0xf]
    %v908 = vld [vmem:[#allocation8 + $0x168] sm:$0xff]
    %v909 = vld [vmem:[#allocation8 + $0x170] sm:$0xf]
    %v910 = vld [vmem:[#allocation8 + $0x174] sm:$0xff]
    %v911 = vld [vmem:[#allocation8 + $0x17c] sm:$0xf]
    %v912 = vld [vmem:[#allocation8 + $0x180] sm:$0xff]
    %v913 = vld [vmem:[#allocation8 + $0x188] sm:$0xf]
    %v914 = vld [vmem:[#allocation8 + $0x18c] sm:$0xff]
    %v915 = vld [vmem:[#allocation8 + $0x194] sm:$0xf]
    %v916 = vld [vmem:[#allocation8 + $0x198] sm:$0xff]
    %v917 = vld [vmem:[#allocation8 + $0x1a0] sm:$0xf]
    %v918 = vld [vmem:[#allocation8 + $0x1a4] sm:$0xff]
    %v919 = vld [vmem:[#allocation8 + $0x1ac] sm:$0xf]
    %v920 = vld [vmem:[#allocation8 + $0x1b0] sm:$0xff]
    %v921 = vld [vmem:[#allocation8 + $0x1b8] sm:$0xf]
    %v922 = vld [vmem:[#allocation8 + $0x1bc] sm:$0x33]
    %v923 = vld [vmem:[#allocation8 + $0x1c4] sm:$0x3]
    %v924 = vld [vmem:[%s4] sm:$0x7]
    %v926 = vperm.slane %v924, 0
    %v927 = vperm.slane %v924, 1
    %v928 = vperm.slane %v924, 2
    %v948 = vunpack.c.l.b16 %v815
    %v949 = vunpack.c.h.b16 %v815
    %v950 = vunpack.c.l.b16 %v816
    %v951 = vunpack.c.l.b16 %v817
    %v952 = vunpack.c.h.b16 %v817
    %v953 = vunpack.c.l.b16 %v818
    %v954 = vunpack.c.l.b16 %v819
    %v955 = vunpack.c.h.b16 %v819
    %v956 = vunpack.c.l.b16 %v820
    %v957 = vunpack.c.l.b16 %v821
    %v958 = vunpack.c.h.b16 %v821
    %v959 = vunpack.c.l.b16 %v822
    %v960 = vunpack.c.l.b16 %v823
    %v961 = vunpack.c.h.b16 %v823
    %v962 = vunpack.c.l.b16 %v824
    %v963 = vunpack.c.l.b16 %v825
    %v964 = vunpack.c.h.b16 %v825
    %v965 = vunpack.c.l.b16 %v826
    %v966 = vunpack.c.l.b16 %v827
    %v967 = vunpack.c.h.b16 %v827
    %v968 = vunpack.c.l.b16 %v828
    %v969 = vunpack.c.l.b16 %v829
    %v970 = vunpack.c.h.b16 %v829
    %v971 = vunpack.c.l.b16 %v830
    %v972 = vpack.c.b16 %v951, %v948
    %v973 = vpack.c.b16 %v952, %v949
    %v974 = vpack.c.b16 %v953, %v950
    %v975 = vpack.c.b16 %v957, %v954
    %v976 = vpack.c.b16 %v958, %v955
    %v977 = vpack.c.b16 %v959, %v956
    %v978 = vpack.c.b16 %v963, %v960
    %v979 = vpack.c.b16 %v964, %v961
    %v980 = vpack.c.b16 %v965, %v962
    %v981 = vpack.c.b16 %v969, %v966
    %v982 = vpack.c.b16 %v970, %v967
    %v983 = vpack.c.b16 %v971, %v968
    %v1068 = vunpack.c.l.b16 %v848
    %v1069 = vunpack.c.h.b16 %v848
    %v1070 = vunpack.c.l.b16 %v849
    %v1071 = vunpack.c.l.b16 %v850
    %v1072 = vunpack.c.h.b16 %v850
    %v1073 = vunpack.c.l.b16 %v851
    %v1074 = vunpack.c.l.b16 %v852
    %v1075 = vunpack.c.h.b16 %v852
    %v1076 = vunpack.c.l.b16 %v853
    %v1077 = vunpack.c.l.b16 %v854
    %v1078 = vunpack.c.h.b16 %v854
    %v1079 = vunpack.c.l.b16 %v855
    %v1080 = vunpack.c.l.b16 %v856
    %v1081 = vunpack.c.h.b16 %v856
    %v1082 = vunpack.c.l.b16 %v857
    %v1083 = vunpack.c.l.b16 %v858
    %v1084 = vunpack.c.h.b16 %v858
    %v1085 = vunpack.c.l.b16 %v859
    %v1086 = vunpack.c.l.b16 %v860
    %v1087 = vunpack.c.h.b16 %v860
    %v1088 = vunpack.c.l.b16 %v861
    %v1089 = vunpack.c.l.b16 %v862
    %v1090 = vunpack.c.h.b16 %v862
    %v1091 = vunpack.c.l.b16 %v863
    %v1092 = vunpack.c.l.b16 %v864
    %v1093 = vunpack.c.h.b16 %v864
    %v1094 = vunpack.c.l.b16 %v865
    %v1095 = vunpack.c.l.b16 %v866
    %v1096 = vunpack.c.h.b16 %v866
    %v1097 = vunpack.c.l.b16 %v867
    %v1098 = vunpack.c.l.b16 %v868
    %v1099 = vunpack.c.h.b16 %v868
    %v1100 = vunpack.c.l.b16 %v869
    %v1101 = vunpack.c.l.b16 %v870
    %v1102 = vunpack.c.h.b16 %v870
    %v1103 = vunpack.c.l.b16 %v871
    %v1104 = vunpack.c.l.b16 %v872
    %v1105 = vunpack.c.h.b16 %v872
    %v1106 = vunpack.c.l.b16 %v873
    %v1107 = vunpack.c.l.b16 %v874
    %v1108 = vunpack.c.h.b16 %v874
    %v1109 = vunpack.c.l.b16 %v875
    %v1110 = vunpack.c.l.b16 %v876
    %v1111 = vunpack.c.h.b16 %v876
    %v1112 = vunpack.c.l.b16 %v877
    %v1113 = vunpack.c.l.b16 %v878
    %v1114 = vunpack.c.h.b16 %v878
    %v1115 = vunpack.c.l.b16 %v879
    %v1116 = vunpack.c.l.b16 %v880
    %v1117 = vunpack.c.h.b16 %v880
    %v1118 = vunpack.c.l.b16 %v881
    %v1119 = vunpack.c.l.b16 %v882
    %v1120 = vunpack.c.h.b16 %v882
    %v1121 = vunpack.c.l.b16 %v883
    %v1122 = vunpack.c.l.b16 %v884
    %v1123 = vunpack.c.h.b16 %v884
    %v1124 = vunpack.c.l.b16 %v885
    %v1125 = vunpack.c.l.b16 %v886
    %v1126 = vunpack.c.h.b16 %v886
    %v1127 = vunpack.c.l.b16 %v887
    %v1128 = vunpack.c.l.b16 %v888
    %v1129 = vunpack.c.h.b16 %v888
    %v1130 = vunpack.c.l.b16 %v889
    %v1131 = vunpack.c.l.b16 %v890
    %v1132 = vunpack.c.h.b16 %v890
    %v1133 = vunpack.c.l.b16 %v891
    %v1134 = vunpack.c.l.b16 %v892
    %v1135 = vunpack.c.h.b16 %v892
    %v1136 = vunpack.c.l.b16 %v893
    %v1137 = vunpack.c.l.b16 %v894
    %v1138 = vunpack.c.h.b16 %v894
    %v1139 = vunpack.c.l.b16 %v895
    %v1140 = vunpack.c.l.b16 %v896
    %v1141 = vunpack.c.h.b16 %v896
    %v1142 = vunpack.c.l.b16 %v897
    %v1143 = vunpack.c.l.b16 %v898
    %v1144 = vunpack.c.h.b16 %v898
    %v1145 = vunpack.c.l.b16 %v899
    %v1146 = vunpack.c.l.b16 %v900
    %v1147 = vunpack.c.h.b16 %v900
    %v1148 = vunpack.c.l.b16 %v901
    %v1149 = vunpack.c.l.b16 %v902
    %v1150 = vunpack.c.h.b16 %v902
    %v1151 = vunpack.c.l.b16 %v903
    %v1152 = vunpack.c.l.b16 %v904
    %v1153 = vunpack.c.h.b16 %v904
    %v1154 = vunpack.c.l.b16 %v905
    %v1155 = vunpack.c.l.b16 %v906
    %v1156 = vunpack.c.h.b16 %v906
    %v1157 = vunpack.c.l.b16 %v907
    %v1158 = vunpack.c.l.b16 %v908
    %v1159 = vunpack.c.h.b16 %v908
    %v1160 = vunpack.c.l.b16 %v909
    %v1161 = vunpack.c.l.b16 %v910
    %v1162 = vunpack.c.h.b16 %v910
    %v1163 = vunpack.c.l.b16 %v911
    %v1164 = vunpack.c.l.b16 %v912
    %v1165 = vunpack.c.h.b16 %v912
    %v1166 = vunpack.c.l.b16 %v913
    %v1167 = vunpack.c.l.b16 %v914
    %v1168 = vunpack.c.h.b16 %v914
    %v1169 = vunpack.c.l.b16 %v915
    %v1170 = vunpack.c.l.b16 %v916
    %v1171 = vunpack.c.h.b16 %v916
    %v1172 = vunpack.c.l.b16 %v917
    %v1173 = vunpack.c.l.b16 %v918
    %v1174 = vunpack.c.h.b16 %v918
    %v1175 = vunpack.c.l.b16 %v919
    %v1176 = vunpack.c.l.b16 %v920
    %v1177 = vunpack.c.h.b16 %v920
    %v1178 = vunpack.c.l.b16 %v921
    %v1179 = vunpack.c.l.b16 %v922
    %v1180 = vunpack.c.h.b16 %v922
    %v1181 = vunpack.c.l.b16 %v923
    %v1182 = vpack.c.b16 %v1071, %v1068
    %v1183 = vpack.c.b16 %v1072, %v1069
    %v1184 = vpack.c.b16 %v1073, %v1070
    %v1185 = vpack.c.b16 %v1077, %v1074
    %v1186 = vpack.c.b16 %v1078, %v1075
    %v1187 = vpack.c.b16 %v1079, %v1076
    %v1188 = vpack.c.b16 %v1083, %v1080
    %v1189 = vpack.c.b16 %v1084, %v1081
    %v1190 = vpack.c.b16 %v1085, %v1082
    %v1191 = vpack.c.b16 %v1089, %v1086
    %v1192 = vpack.c.b16 %v1090, %v1087
    %v1193 = vpack.c.b16 %v1091, %v1088
    %v1194 = vpack.c.b16 %v1095, %v1092
    %v1195 = vpack.c.b16 %v1096, %v1093
    %v1196 = vpack.c.b16 %v1097, %v1094
    %v1197 = vpack.c.b16 %v1101, %v1098
    %v1198 = vpack.c.b16 %v1102, %v1099
    %v1199 = vpack.c.b16 %v1103, %v1100
    %v1200 = vpack.c.b16 %v1107, %v1104
    %v1201 = vpack.c.b16 %v1108, %v1105
    %v1202 = vpack.c.b16 %v1109, %v1106
    %v1203 = vpack.c.b16 %v1113, %v1110
    %v1204 = vpack.c.b16 %v1114, %v1111
    %v1205 = vpack.c.b16 %v1115, %v1112
    %v1206 = vpack.c.b16 %v1119, %v1116
    %v1207 = vpack.c.b16 %v1120, %v1117
    %v1208 = vpack.c.b16 %v1121, %v1118
    %v1209 = vpack.c.b16 %v1125, %v1122
    %v1210 = vpack.c.b16 %v1126, %v1123
    %v1211 = vpack.c.b16 %v1127, %v1124
    %v1212 = vpack.c.b16 %v1131, %v1128
    %v1213 = vpack.c.b16 %v1132, %v1129
    %v1214 = vpack.c.b16 %v1133, %v1130
    %v1215 = vpack.c.b16 %v1137, %v1134
    %v1216 = vpack.c.b16 %v1138, %v1135
    %v1217 = vpack.c.b16 %v1139, %v1136
    %v1218 = vpack.c.b16 %v1143, %v1140
    %v1219 = vpack.c.b16 %v1144, %v1141
    %v1220 = vpack.c.b16 %v1145, %v1142
    %v1221 = vpack.c.b16 %v1149, %v1146
    %v1222 = vpack.c.b16 %v1150, %v1147
    %v1223 = vpack.c.b16 %v1151, %v1148
    %v1224 = vpack.c.b16 %v1155, %v1152
    %v1225 = vpack.c.b16 %v1156, %v1153
    %v1226 = vpack.c.b16 %v1157, %v1154
    %v1227 = vpack.c.b16 %v1161, %v1158
    %v1228 = vpack.c.b16 %v1162, %v1159
    %v1229 = vpack.c.b16 %v1163, %v1160
    %v1230 = vpack.c.b16 %v1167, %v1164
    %v1231 = vpack.c.b16 %v1168, %v1165
    %v1232 = vpack.c.b16 %v1169, %v1166
    %v1233 = vpack.c.b16 %v1173, %v1170
    %v1234 = vpack.c.b16 %v1174, %v1171
    %v1235 = vpack.c.b16 %v1175, %v1172
    %v1236 = vpack.c.b16 %v1179, %v1176
    %v1237 = vpack.c.b16 %v1180, %v1177
    %v1238 = vpack.c.b16 %v1181, %v1178
    %v1294 = vsel %vm507, %v974, 0
    %v1297 = vsel %vm507, %v977, 0
    %v1300 = vsel %vm507, %v980, 0
    %v1303 = vsel %vm507, %v983, 0
    %v1306 = vsel %vm520, %v1236, 0
    %v1309 = vsel %vm520, %v1237, 0
    %v1312 = vsel %vm520, %v1238, 0
    %1314 = vmatpush.bf16.msra.mxu0 %v1203
    %1315 = vmatpush.bf16.msra.mxu0 %v1200
    %1316 = vmatpush.bf16.msra.mxu0 %v1197
    %1317 = vmatpush.bf16.msra.mxu0 %v1194
    %1318 = vmatpush.bf16.msra.mxu0 %v1191
    %1319 = vmatpush.bf16.msra.mxu0 %v1188
    %1320 = vmatpush.bf16.msra.mxu0 %v1185
    %1321 = vmatpush.bf16.msra.mxu0 %v1182
    %1322 = vmatmul.bf16.gmra.mxu0 %v972
    %v1323 = vpop.f32.mrf.mxu0
    %v1324 = vadd.f32 %v926, %v1323
    %v1325 = vpop.f32.mrf.mxu0
    %v1326 = vadd.f32 %v926, %v1325
    %1327 = vmatmul.bf16.gmra.mxu0 %v975
    %v1328 = vpop.f32.mrf.mxu0
    %v1329 = vadd.f32 %v926, %v1328
    %v1330 = vpop.f32.mrf.mxu0
    %v1331 = vadd.f32 %v926, %v1330
    %1332 = vmatmul.bf16.gmra.mxu0 %v978
    %v1333 = vpop.f32.mrf.mxu0
    %v1334 = vadd.f32 %v926, %v1333
    %v1335 = vpop.f32.mrf.mxu0
    %v1336 = vadd.f32 %v926, %v1335
    %1337 = vmatmul.bf16.gmra.mxu0 %v981
    %v1338 = vpop.f32.mrf.mxu0
    %v1339 = vadd.f32 %v926, %v1338
    %v1340 = vpop.f32.mrf.mxu0
    %v1341 = vadd.f32 %v926, %v1340
    %1342 = vdwg.mxu0
    %1343 = vmatpush.bf16.msra.mxu0 %v1227
    %1344 = vmatpush.bf16.msra.mxu0 %v1224
    %1345 = vmatpush.bf16.msra.mxu0 %v1221
    %1346 = vmatpush.bf16.msra.mxu0 %v1218
    %1347 = vmatpush.bf16.msra.mxu0 %v1215
    %1348 = vmatpush.bf16.msra.mxu0 %v1212
    %1349 = vmatpush.bf16.msra.mxu0 %v1209
    %1350 = vmatpush.bf16.msra.mxu0 %v1206
    %1351 = vmatmul.bf16.gmra.mxu0 %v973
    %v1352 = vpop.f32.mrf.mxu0
    %v1353 = vadd.f32 %v1324, %v1352
    %v1354 = vpop.f32.mrf.mxu0
    %v1355 = vadd.f32 %v1326, %v1354
    %1356 = vmatmul.bf16.gmra.mxu0 %v976
    %v1357 = vpop.f32.mrf.mxu0
    %v1358 = vadd.f32 %v1329, %v1357
    %v1359 = vpop.f32.mrf.mxu0
    %v1360 = vadd.f32 %v1331, %v1359
    %1361 = vmatmul.bf16.gmra.mxu0 %v979
    %v1362 = vpop.f32.mrf.mxu0
    %v1363 = vadd.f32 %v1334, %v1362
    %v1364 = vpop.f32.mrf.mxu0
    %v1365 = vadd.f32 %v1336, %v1364
    %1366 = vmatmul.bf16.gmra.mxu0 %v982
    %v1367 = vpop.f32.mrf.mxu0
    %v1368 = vadd.f32 %v1339, %v1367
    %v1369 = vpop.f32.mrf.mxu0
    %v1370 = vadd.f32 %v1341, %v1369
    %1371 = vdwg.mxu0
    %1372 = vmatpush.bf16.msra.mxu0 0
    %1373 = vmatpush.bf16.msra.mxu0 0
    %1374 = vmatpush.bf16.msra.mxu0 0
    %1375 = vmatpush.bf16.msra.mxu0 0
    %1376 = vmatpush.bf16.msra.mxu0 0
    %1377 = vmatpush.bf16.msra.mxu0 %v1306
    %1378 = vmatpush.bf16.msra.mxu0 %v1233
    %1379 = vmatpush.bf16.msra.mxu0 %v1230
    %1380 = vmatmul.bf16.gmra.mxu0 %v1294
    %v1381 = vpop.f32.mrf.mxu0
    %v1382 = vadd.f32 %v1353, %v1381
    %v1383 = vpop.f32.mrf.mxu0
    %v1384 = vadd.f32 %v1355, %v1383
    %1385 = vmatmul.bf16.gmra.mxu0 %v1297
    %v1386 = vpop.f32.mrf.mxu0
    %v1387 = vadd.f32 %v1358, %v1386
    %v1388 = vpop.f32.mrf.mxu0
    %v1389 = vadd.f32 %v1360, %v1388
    %1390 = vmatmul.bf16.gmra.mxu0 %v1300
    %v1391 = vpop.f32.mrf.mxu0
    %v1392 = vadd.f32 %v1363, %v1391
    %v1393 = vpop.f32.mrf.mxu0
    %v1394 = vadd.f32 %v1365, %v1393
    %1395 = vmatmul.bf16.gmra.mxu0 %v1303
    %v1396 = vpop.f32.mrf.mxu0
    %v1397 = vadd.f32 %v1368, %v1396
    %v1398 = vpop.f32.mrf.mxu0
    %v1399 = vadd.f32 %v1370, %v1398
    %1400 = vdwg.mxu0
    %1401 = vmatpush.bf16.msra.mxu0 %v1204
    %1402 = vmatpush.bf16.msra.mxu0 %v1201
    %1403 = vmatpush.bf16.msra.mxu0 %v1198
    %1404 = vmatpush.bf16.msra.mxu0 %v1195
    %1405 = vmatpush.bf16.msra.mxu0 %v1192
    %1406 = vmatpush.bf16.msra.mxu0 %v1189
    %1407 = vmatpush.bf16.msra.mxu0 %v1186
    %1408 = vmatpush.bf16.msra.mxu0 %v1183
    %1409 = vmatmul.bf16.gmra.mxu0 %v972
    %v1410 = vpop.f32.mrf.mxu0
    %v1411 = vadd.f32 %v927, %v1410
    %v1412 = vpop.f32.mrf.mxu0
    %v1413 = vadd.f32 %v927, %v1412
    %1414 = vmatmul.bf16.gmra.mxu0 %v975
    %v1415 = vpop.f32.mrf.mxu0
    %v1416 = vadd.f32 %v927, %v1415
    %v1417 = vpop.f32.mrf.mxu0
    %v1418 = vadd.f32 %v927, %v1417
    %1419 = vmatmul.bf16.gmra.mxu0 %v978
    %v1420 = vpop.f32.mrf.mxu0
    %v1421 = vadd.f32 %v927, %v1420
    %v1422 = vpop.f32.mrf.mxu0
    %v1423 = vadd.f32 %v927, %v1422
    %1424 = vmatmul.bf16.gmra.mxu0 %v981
    %v1425 = vpop.f32.mrf.mxu0
    %v1426 = vadd.f32 %v927, %v1425
    %v1427 = vpop.f32.mrf.mxu0
    %v1428 = vadd.f32 %v927, %v1427
    %1429 = vdwg.mxu0
    %1430 = vmatpush.bf16.msra.mxu0 %v1228
    %1431 = vmatpush.bf16.msra.mxu0 %v1225
    %1432 = vmatpush.bf16.msra.mxu0 %v1222
    %1433 = vmatpush.bf16.msra.mxu0 %v1219
    %1434 = vmatpush.bf16.msra.mxu0 %v1216
    %1435 = vmatpush.bf16.msra.mxu0 %v1213
    %1436 = vmatpush.bf16.msra.mxu0 %v1210
    %1437 = vmatpush.bf16.msra.mxu0 %v1207
    %1438 = vmatmul.bf16.gmra.mxu0 %v973
    %v1439 = vpop.f32.mrf.mxu0
    %v1440 = vadd.f32 %v1411, %v1439
    %v1441 = vpop.f32.mrf.mxu0
    %v1442 = vadd.f32 %v1413, %v1441
    %1443 = vmatmul.bf16.gmra.mxu0 %v976
    %v1444 = vpop.f32.mrf.mxu0
    %v1445 = vadd.f32 %v1416, %v1444
    %v1446 = vpop.f32.mrf.mxu0
    %v1447 = vadd.f32 %v1418, %v1446
    %1448 = vmatmul.bf16.gmra.mxu0 %v979
    %v1449 = vpop.f32.mrf.mxu0
    %v1450 = vadd.f32 %v1421, %v1449
    %v1451 = vpop.f32.mrf.mxu0
    %v1452 = vadd.f32 %v1423, %v1451
    %1453 = vmatmul.bf16.gmra.mxu0 %v982
    %v1454 = vpop.f32.mrf.mxu0
    %v1455 = vadd.f32 %v1426, %v1454
    %v1456 = vpop.f32.mrf.mxu0
    %v1457 = vadd.f32 %v1428, %v1456
    %1458 = vdwg.mxu0
    %1459 = vmatpush.bf16.msra.mxu0 0
    %1460 = vmatpush.bf16.msra.mxu0 0
    %1461 = vmatpush.bf16.msra.mxu0 0
    %1462 = vmatpush.bf16.msra.mxu0 0
    %1463 = vmatpush.bf16.msra.mxu0 0
    %1464 = vmatpush.bf16.msra.mxu0 %v1309
    %1465 = vmatpush.bf16.msra.mxu0 %v1234
    %1466 = vmatpush.bf16.msra.mxu0 %v1231
    %1467 = vmatmul.bf16.gmra.mxu0 %v1294
    %v1468 = vpop.f32.mrf.mxu0
    %v1469 = vadd.f32 %v1440, %v1468
    %v1470 = vpop.f32.mrf.mxu0
    %v1471 = vadd.f32 %v1442, %v1470
    %1472 = vmatmul.bf16.gmra.mxu0 %v1297
    %v1473 = vpop.f32.mrf.mxu0
    %v1474 = vadd.f32 %v1445, %v1473
    %v1475 = vpop.f32.mrf.mxu0
    %v1476 = vadd.f32 %v1447, %v1475
    %1477 = vmatmul.bf16.gmra.mxu0 %v1300
    %v1478 = vpop.f32.mrf.mxu0
    %v1479 = vadd.f32 %v1450, %v1478
    %v1480 = vpop.f32.mrf.mxu0
    %v1481 = vadd.f32 %v1452, %v1480
    %1482 = vmatmul.bf16.gmra.mxu0 %v1303
    %v1483 = vpop.f32.mrf.mxu0
    %v1484 = vadd.f32 %v1455, %v1483
    %v1485 = vpop.f32.mrf.mxu0
    %v1486 = vadd.f32 %v1457, %v1485
    %1487 = vdwg.mxu0
    %1488 = vmatpush.bf16.msra.mxu0 %v1205
    %1489 = vmatpush.bf16.msra.mxu0 %v1202
    %1490 = vmatpush.bf16.msra.mxu0 %v1199
    %1491 = vmatpush.bf16.msra.mxu0 %v1196
    %1492 = vmatpush.bf16.msra.mxu0 %v1193
    %1493 = vmatpush.bf16.msra.mxu0 %v1190
    %1494 = vmatpush.bf16.msra.mxu0 %v1187
    %1495 = vmatpush.bf16.msra.mxu0 %v1184
    %1496 = vmatmul.bf16.gmra.mxu0 %v972
    %v1497 = vpop.f32.mrf.mxu0
    %v1498 = vadd.f32 %v928, %v1497
    %v1499 = vpop.f32.mrf.mxu0
    %v1500 = vadd.f32 %v928, %v1499
    %1501 = vmatmul.bf16.gmra.mxu0 %v975
    %v1502 = vpop.f32.mrf.mxu0
    %v1503 = vadd.f32 %v928, %v1502
    %v1504 = vpop.f32.mrf.mxu0
    %v1505 = vadd.f32 %v928, %v1504
    %1506 = vmatmul.bf16.gmra.mxu0 %v978
    %v1507 = vpop.f32.mrf.mxu0
    %v1508 = vadd.f32 %v928, %v1507
    %v1509 = vpop.f32.mrf.mxu0
    %v1510 = vadd.f32 %v928, %v1509
    %1511 = vmatmul.bf16.gmra.mxu0 %v981
    %v1512 = vpop.f32.mrf.mxu0
    %v1513 = vadd.f32 %v928, %v1512
    %v1514 = vpop.f32.mrf.mxu0
    %v1515 = vadd.f32 %v928, %v1514
    %1516 = vdwg.mxu0
    %1517 = vmatpush.bf16.msra.mxu0 %v1229
    %1518 = vmatpush.bf16.msra.mxu0 %v1226
    %1519 = vmatpush.bf16.msra.mxu0 %v1223
    %1520 = vmatpush.bf16.msra.mxu0 %v1220
    %1521 = vmatpush.bf16.msra.mxu0 %v1217
    %1522 = vmatpush.bf16.msra.mxu0 %v1214
    %1523 = vmatpush.bf16.msra.mxu0 %v1211
    %1524 = vmatpush.bf16.msra.mxu0 %v1208
    %1525 = vmatmul.bf16.gmra.mxu0 %v973
    %v1526 = vpop.f32.mrf.mxu0
    %v1527 = vadd.f32 %v1498, %v1526
    %v1528 = vpop.f32.mrf.mxu0
    %v1529 = vadd.f32 %v1500, %v1528
    %1530 = vmatmul.bf16.gmra.mxu0 %v976
    %v1531 = vpop.f32.mrf.mxu0
    %v1532 = vadd.f32 %v1503, %v1531
    %v1533 = vpop.f32.mrf.mxu0
    %v1534 = vadd.f32 %v1505, %v1533
    %1535 = vmatmul.bf16.gmra.mxu0 %v979
    %v1536 = vpop.f32.mrf.mxu0
    %v1537 = vadd.f32 %v1508, %v1536
    %v1538 = vpop.f32.mrf.mxu0
    %v1539 = vadd.f32 %v1510, %v1538
    %1540 = vmatmul.bf16.gmra.mxu0 %v982
    %v1541 = vpop.f32.mrf.mxu0
    %v1542 = vadd.f32 %v1513, %v1541
    %v1543 = vpop.f32.mrf.mxu0
    %v1544 = vadd.f32 %v1515, %v1543
    %1545 = vdwg.mxu0
    %1546 = vmatpush.bf16.msra.mxu0 0
    %1547 = vmatpush.bf16.msra.mxu0 0
    %1548 = vmatpush.bf16.msra.mxu0 0
    %1549 = vmatpush.bf16.msra.mxu0 0
    %1550 = vmatpush.bf16.msra.mxu0 0
    %1551 = vmatpush.bf16.msra.mxu0 %v1312
    %1552 = vmatpush.bf16.msra.mxu0 %v1235
    %1553 = vmatpush.bf16.msra.mxu0 %v1232
    %1554 = vmatmul.bf16.gmra.mxu0 %v1294
    %v1555 = vpop.f32.mrf.mxu0
    %v1556 = vadd.f32 %v1527, %v1555
    %v1557 = vpop.f32.mrf.mxu0
    %v1558 = vadd.f32 %v1529, %v1557
    %1559 = vmatmul.bf16.gmra.mxu0 %v1297
    %v1560 = vpop.f32.mrf.mxu0
    %v1561 = vadd.f32 %v1532, %v1560
    %v1562 = vpop.f32.mrf.mxu0
    %v1563 = vadd.f32 %v1534, %v1562
    %1564 = vmatmul.bf16.gmra.mxu0 %v1300
    %v1565 = vpop.f32.mrf.mxu0
    %v1566 = vadd.f32 %v1537, %v1565
    %v1567 = vpop.f32.mrf.mxu0
    %v1568 = vadd.f32 %v1539, %v1567
    %1569 = vmatmul.bf16.gmra.mxu0 %v1303
    %v1570 = vpop.f32.mrf.mxu0
    %v1571 = vadd.f32 %v1542, %v1570
    %v1572 = vpop.f32.mrf.mxu0
    %v1573 = vadd.f32 %v1544, %v1572
    %1574 = vdwg.mxu0
    %v1575 = vmax.f32 %v1382, 0.0
    %v1576 = vmax.f32 %v1469, 0.0
    %v1577 = vmax.f32 %v1556, 0.0
    %v1578 = vmax.f32 %v1384, 0.0
    %v1579 = vmax.f32 %v1471, 0.0
    %v1580 = vmax.f32 %v1558, 0.0
    %v1581 = vmax.f32 %v1387, 0.0
    %v1582 = vmax.f32 %v1474, 0.0
    %v1583 = vmax.f32 %v1561, 0.0
    %v1584 = vmax.f32 %v1389, 0.0
    %v1585 = vmax.f32 %v1476, 0.0
    %v1586 = vmax.f32 %v1563, 0.0
    %v1587 = vmax.f32 %v1392, 0.0
    %v1588 = vmax.f32 %v1479, 0.0
    %v1589 = vmax.f32 %v1566, 0.0
    %v1590 = vmax.f32 %v1394, 0.0
    %v1591 = vmax.f32 %v1481, 0.0
    %v1592 = vmax.f32 %v1568, 0.0
    %v1593 = vmax.f32 %v1397, 0.0
    %v1594 = vmax.f32 %v1484, 0.0
    %v1595 = vmax.f32 %v1571, 0.0
    %v1596 = vmax.f32 %v1399, 0.0
    %v1597 = vmax.f32 %v1486, 0.0
    %v1598 = vmax.f32 %v1573, 0.0
    %v1599 = vpack.c.bf16 %v1576, %v1575
    %v1600 = vpack.c.bf16 %v1577, %v1577
    %v1601 = vpack.c.bf16 %v1579, %v1578
    %v1602 = vpack.c.bf16 %v1580, %v1580
    %v1603 = vpack.c.bf16 %v1582, %v1581
    %v1604 = vpack.c.bf16 %v1583, %v1583
    %v1605 = vpack.c.bf16 %v1585, %v1584
    %v1606 = vpack.c.bf16 %v1586, %v1586
    %v1607 = vpack.c.bf16 %v1588, %v1587
    %v1608 = vpack.c.bf16 %v1589, %v1589
    %v1609 = vpack.c.bf16 %v1591, %v1590
    %v1610 = vpack.c.bf16 %v1592, %v1592
    %v1611 = vpack.c.bf16 %v1594, %v1593
    %v1612 = vpack.c.bf16 %v1595, %v1595
    %v1613 = vpack.c.bf16 %v1597, %v1596
    %v1614 = vpack.c.bf16 %v1598, %v1598
    %1615 = vst [vmem:[#allocation11] sm:$0xff] %v1599
    %1616 = vst.msk [vmem:[#allocation11 + $0x8] sm:$0xf] %vm832, %v1600
    %1617 = vst [vmem:[#allocation11 + $0xc] sm:$0xff] %v1601
    %1618 = vst.msk [vmem:[#allocation11 + $0x14] sm:$0xf] %vm832, %v1602
    %1619 = vst [vmem:[#allocation11 + $0x18] sm:$0xff] %v1603
    %1620 = vst.msk [vmem:[#allocation11 + $0x20] sm:$0xf] %vm832, %v1604
    %1621 = vst [vmem:[#allocation11 + $0x24] sm:$0xff] %v1605
    %1622 = vst.msk [vmem:[#allocation11 + $0x2c] sm:$0xf] %vm832, %v1606
    %1623 = vst [vmem:[#allocation11 + $0x30] sm:$0xff] %v1607
    %1624 = vst.msk [vmem:[#allocation11 + $0x38] sm:$0xf] %vm832, %v1608
    %1625 = vst [vmem:[#allocation11 + $0x3c] sm:$0xff] %v1609
    %1626 = vst.msk [vmem:[#allocation11 + $0x44] sm:$0xf] %vm832, %v1610
    %1627 = vst [vmem:[#allocation11 + $0x48] sm:$0xff] %v1611
    %1628 = vst.msk [vmem:[#allocation11 + $0x50] sm:$0xf] %vm832, %v1612
    %1629 = vst [vmem:[#allocation11 + $0x54] sm:$0xff] %v1613
    %1630 = vst.msk [vmem:[#allocation11 + $0x5c] sm:$0xf] %vm832, %v1614
    // Predicated region
    $region38: #{auto_encoder_forward.1} parent=1 // pred_check
      _
    $region39: #{auto_encoder_forward.1} parent=1 // pred_check_branch
      %1632 = sbr.rel (0) target = $region41
    $region40: #{auto_encoder_forward.1} parent=1 // pred_region
      %1634 = vsyncadd [#allocation4], 0
      %s1635 = sshll.u32 [#allocation10], 4
      %s1636 = int_to_ptr.vmem [resolvable:$true] %s1635
      %s1637 = sshll.u32 %s5, 4
      %s1638 = int_to_ptr.hbm [resolvable:$true] %s1637
      %1643 = dma.vmem_to_hbm [thread:$0]  %s1636, 1536, %s1638, [#allocation4], 192, 192, 12
    $region41: #{auto_encoder_forward.1} parent=1 // pred_fallthru
      _
    // Predicated region
    $region42: #{auto_encoder_forward.1} parent=1 // pred_check
      _
    $region43: #{auto_encoder_forward.1} parent=1 // pred_check_branch
      %1645 = sbr.rel (0) target = $region45
    $region44: #{auto_encoder_forward.1} parent=1 // pred_region
      %1647 = vsyncadd [#allocation12], 0
      %s1648 = sshll.u32 [#allocation11], 4
      %s1649 = int_to_ptr.vmem [resolvable:$true] %s1648
      %s1650 = sshll.u32 %s6, 4
      %s1651 = int_to_ptr.hbm [resolvable:$true] %s1650
      %1656 = dma.vmem_to_hbm [thread:$0]  %s1649, 1536, %s1651, [#allocation12], 192, 192, 12
    $region45: #{auto_encoder_forward.1} parent=1 // pred_fallthru
      _
    // Predicated region
    $region46: #{auto_encoder_forward.1} parent=1 // pred_check
      _
    $region47: #{auto_encoder_forward.1} parent=1 // pred_check_branch
      %1658 = sbr.rel (0) target = $region49
    $region48: #{auto_encoder_forward.1} parent=1 // pred_region
      %1660 = dma.done [#allocation4], 1536
    $region49: #{auto_encoder_forward.1} parent=1 // pred_fallthru
      _
    // Predicated region
    $region50: #{auto_encoder_forward.1} parent=1 // pred_check
      _
    $region51: #{auto_encoder_forward.1} parent=1 // pred_check_branch
      %1662 = sbr.rel (0) target = $region53
    $region52: #{auto_encoder_forward.1} parent=1 // pred_region
      %1664 = dma.done [#allocation12], 1536
    $region53: #{auto_encoder_forward.1} parent=1 // pred_fallthru
      _
    %1665 = vsyncpa [#allocation3], 1
    %1666 = vsyncpa [#allocation6], 1
    %1667 = vsyncpa [#allocation9], 1
    %1668 = vsyncpa [#allocation4], 1
    %1669 = vsyncpa [#allocation12], 1

</llo_original>
